<compile_context>
chip_gen: v7x
topology: tpu7x:2x2x1
jax: 0.10.0
libtpu: 0.0.40
codegen_flags: <defaults>
</compile_context>

<pallas_src>
import functools
import math

import jax
import jax.numpy as jnp
from jax.experimental import pallas as pl
from jax.experimental.pallas import tpu as pltpu


def _round_up(x, m):
    return ((x + m - 1) // m) * m


def _choose_tile(dim, cap, align):
    """Full-dim block if it fits under `cap` (no padding needed), else the largest
    `align`-multiple <= cap that divides `dim`, else `cap` (caller pads)."""
    if dim <= cap:
        return dim
    t = (cap // align) * align
    while t >= align:
        if dim % t == 0:
            return t
        t -= align
    return cap


# ----------------------------------------------------------------------------
# Tiled linear: X @ W + b (bf16 MXU inputs, f32 VMEM accumulator)
# ----------------------------------------------------------------------------

def _linear_kernel(x_ref, w_ref, b_ref, o_ref, acc_ref, *, activation):
    @pl.when(pl.program_id(2) == 0)
    def _():
        acc_ref[...] = jnp.zeros_like(acc_ref)

    acc_ref[...] += jnp.dot(
        x_ref[...].astype(jnp.bfloat16),
        w_ref[...].astype(jnp.bfloat16),
        preferred_element_type=jnp.float32)

    @pl.when(pl.program_id(2) == pl.num_programs(2) - 1)
    def _():
        out = acc_ref[...] + b_ref[...].astype(jnp.float32)
        if activation == "relu":
            out = jnp.maximum(out, 0.0)
        o_ref[...] = out.astype(o_ref.dtype)


def linear(x2d, w, b, activation="none", out_dtype=None,
           cap_m=256, cap_n=256, cap_k=512):
    """x2d: [M, K] @ w: [K, N] + b: [N] -> [M, N]."""
    M, K = x2d.shape
    N = w.shape[1]
    out_dtype = out_dtype or x2d.dtype
    # Tiles that divide the real dims (or full-dim blocks) -> no weight padding.
    # Caps kept conservative so double-buffered tiles fit v7x's smaller VMEM.
    tm = _choose_tile(M, cap_m, 8)
    tn = _choose_tile(N, cap_n, 128)
    tk = _choose_tile(K, cap_k, 128)
    Mp, Kp, Np = _round_up(M, tm), _round_up(K, tk), _round_up(N, tn)
    if (Mp, Kp) != (M, K):
        x2d = jnp.pad(x2d, ((0, Mp - M), (0, Kp - K)))
    if (Kp, Np) != (K, N):
        # TODO(synk): only reached for dims with no 128-multiple divisor <= cap;
        # pre-pad such weights once at init to avoid this per-call copy.
        w = jnp.pad(w, ((0, Kp - K), (0, Np - N)))
    if Np != N:
        b = jnp.pad(b, (0, Np - N))

    out = pl.pallas_call(
        functools.partial(_linear_kernel, activation=activation),
        out_shape=jax.ShapeDtypeStruct((Mp, Np), out_dtype),
        grid=(Mp // tm, Np // tn, Kp // tk),
        in_specs=[
            pl.BlockSpec((tm, tk), lambda i, j, k: (i, k)),
            pl.BlockSpec((tk, tn), lambda i, j, k: (k, j)),
            pl.BlockSpec((1, tn), lambda i, j, k: (0, j)),
        ],
        out_specs=pl.BlockSpec((tm, tn), lambda i, j, k: (i, j)),
        scratch_shapes=[pltpu.VMEM((tm, tn), jnp.float32)],
        compiler_params=pltpu.CompilerParams(
            dimension_semantics=("parallel", "parallel", "arbitrary")),
    )(x2d, w, b.reshape(1, Np))

    if (Mp, Np) != (M, N):
        out = out[:M, :N]
    return out


# ----------------------------------------------------------------------------
# Fused FFN: relu(X @ W1 + b1) @ W2 + b2, d_inner tiled (VMEM-bounded)
# ----------------------------------------------------------------------------

def _ffn_kernel(x_ref, w1_ref, b1_ref, w2_ref, b2_ref, o_ref, acc_ref):
    j = pl.program_id(1)

    @pl.when(j == 0)
    def _():
        acc_ref[...] = jnp.zeros_like(acc_ref)

    h = jnp.dot(x_ref[...].astype(jnp.bfloat16),
                w1_ref[...].astype(jnp.bfloat16),
                preferred_element_type=jnp.float32)
    h = jnp.maximum(h + b1_ref[...].astype(jnp.float32), 0.0)
    acc_ref[...] += jnp.dot(h.astype(jnp.bfloat16),
                            w2_ref[...].astype(jnp.bfloat16),
                            preferred_element_type=jnp.float32)

    @pl.when(j == pl.num_programs(1) - 1)
    def _():
        o_ref[...] = (acc_ref[...] + b2_ref[...].astype(jnp.float32)).astype(o_ref.dtype)


def feed_forward_fused(x2d, w1, b1, w2, b2, cap_m=256, cap_h=512):
    M, D = x2d.shape
    Dh = w1.shape[1]
    tm = _choose_tile(M, cap_m, 8)
    th = _choose_tile(Dh, cap_h, 128)
    Mp, Dhp = _round_up(M, tm), _round_up(Dh, th)
    if Mp != M:
        x2d = jnp.pad(x2d, ((0, Mp - M), (0, 0)))
    if Dhp != Dh:
        # TODO(synk): pre-pad FFN weights at init for odd d_inner to avoid this copy.
        w1 = jnp.pad(w1, ((0, 0), (0, Dhp - Dh)))
        b1 = jnp.pad(b1, (0, Dhp - Dh))
        w2 = jnp.pad(w2, ((0, Dhp - Dh), (0, 0)))

    out = pl.pallas_call(
        _ffn_kernel,
        out_shape=jax.ShapeDtypeStruct((Mp, D), x2d.dtype),
        grid=(Mp // tm, Dhp // th),
        in_specs=[
            pl.BlockSpec((tm, D), lambda i, j: (i, 0)),
            pl.BlockSpec((D, th), lambda i, j: (0, j)),
            pl.BlockSpec((1, th), lambda i, j: (0, j)),
            pl.BlockSpec((th, D), lambda i, j: (j, 0)),
            pl.BlockSpec((1, D), lambda i, j: (0, 0)),
        ],
        out_specs=pl.BlockSpec((tm, D), lambda i, j: (i, 0)),
        scratch_shapes=[pltpu.VMEM((tm, D), jnp.float32)],
        compiler_params=pltpu.CompilerParams(
            dimension_semantics=("parallel", "arbitrary")),
    )(x2d, w1, b1.reshape(1, Dhp), w2, b2.reshape(1, D))
    if Mp != M:
        out = out[:M]
    return out


# ----------------------------------------------------------------------------
# Fused residual-add + LayerNorm (row tiled, f32 internal math)
# ----------------------------------------------------------------------------

def _add_ln_kernel(x_ref, y_ref, g_ref, b_ref, o_ref, *, eps):
    x = x_ref[...].astype(jnp.float32) + y_ref[...].astype(jnp.float32)
    mean = jnp.mean(x, axis=-1, keepdims=True)
    cent = x - mean
    var = jnp.mean(cent * cent, axis=-1, keepdims=True)
    y = cent * jax.lax.rsqrt(var + eps)
    o_ref[...] = (y * g_ref[...].astype(jnp.float32)
                  + b_ref[...].astype(jnp.float32)).astype(o_ref.dtype)


def add_layernorm(x2d, y2d, gamma, beta, eps=1e-5, cap_m=512):
    M, D = x2d.shape
    tm = _choose_tile(M, cap_m, 8)
    Mp = _round_up(M, tm)
    if Mp != M:
        x2d = jnp.pad(x2d, ((0, Mp - M), (0, 0)))
        y2d = jnp.pad(y2d, ((0, Mp - M), (0, 0)))
    out = pl.pallas_call(
        functools.partial(_add_ln_kernel, eps=eps),
        out_shape=jax.ShapeDtypeStruct((Mp, D), x2d.dtype),
        grid=(Mp // tm,),
        in_specs=[
            pl.BlockSpec((tm, D), lambda i: (i, 0)),
            pl.BlockSpec((tm, D), lambda i: (i, 0)),
            pl.BlockSpec((1, D), lambda i: (0, 0)),
            pl.BlockSpec((1, D), lambda i: (0, 0)),
        ],
        out_specs=pl.BlockSpec((tm, D), lambda i: (i, 0)),
        compiler_params=pltpu.CompilerParams(dimension_semantics=("parallel",)),
    )(x2d, y2d, gamma.reshape(1, D), beta.reshape(1, D))
    if Mp != M:
        out = out[:M]
    return out


# ----------------------------------------------------------------------------
# Flash-style multi-head attention: grid = (B, H, Sq blocks, Sk blocks)
# ----------------------------------------------------------------------------

def _flash_attn_kernel(*refs, scale, has_mask):
    if has_mask:
        q_ref, k_ref, v_ref, m_ref, o_ref, m_sc, l_sc, acc_sc = refs
    else:
        q_ref, k_ref, v_ref, o_ref, m_sc, l_sc, acc_sc = refs
        m_ref = None

    ki = pl.program_id(3)

    @pl.when(ki == 0)
    def _():
        m_sc[...] = jnp.full_like(m_sc, -1e30)
        l_sc[...] = jnp.zeros_like(l_sc)
        acc_sc[...] = jnp.zeros_like(acc_sc)

    # Fold 1/sqrt(d_k) into q (O(Sq*d)); bf16 MXU operands, f32 accumulation.
    q = (q_ref[...].astype(jnp.float32) * scale).astype(jnp.bfloat16)   # (tq, dk)
    k = k_ref[...].astype(jnp.bfloat16)                                  # (tk, dk)
    v = v_ref[...].astype(jnp.bfloat16)                                  # (tk, dv)

    s = jax.lax.dot_general(q, k, (((1,), (1,)), ((), ())),
                            preferred_element_type=jnp.float32)          # (tq, tk)
    if has_mask:
        keep = m_ref[...].astype(jnp.float32) > 0.5
        s = jnp.where(keep, s, -1e9)   # reference masked_fill(-1e9) convention

    m_prev = m_sc[...]
    m_new = jnp.maximum(m_prev, jnp.max(s, axis=-1, keepdims=True))
    alpha = jnp.exp(m_prev - m_new)
    p = jnp.exp(s - m_new)
    l_sc[...] = alpha * l_sc[...] + jnp.sum(p, axis=-1, keepdims=True)
    acc_sc[...] = alpha * acc_sc[...] + jnp.dot(
        p.astype(jnp.bfloat16), v, preferred_element_type=jnp.float32)
    m_sc[...] = m_new

    @pl.when(ki == pl.num_programs(3) - 1)
    def _():
        l = jnp.maximum(l_sc[...], 1e-30)   # guard (fully-masked rows stay finite)
        o_ref[...] = (acc_sc[...] * pl.reciprocal(l, approx=True)).astype(o_ref.dtype)


def flash_attention(q4, k4, v4, mask_i8, scale):
    """q4: [B,H,Sq,dk], k4: [B,H,Sk,dk], v4: [B,H,Sk,dv], mask_i8: [B,Sq,Sk] or None."""
    B, H, Sq, d_k = q4.shape
    Sk = k4.shape[2]
    d_v = v4.shape[3]

    tq = min(128, _round_up(Sq, 8))
    tk = min(128, _round_up(Sk, 8))
    Sqp, Skp = _round_up(Sq, tq), _round_up(Sk, tk)

    if Sqp != Sq:
        q4 = jnp.pad(q4, ((0, 0), (0, 0), (0, Sqp - Sq), (0, 0)))
    if Skp != Sk:
        k4 = jnp.pad(k4, ((0, 0), (0, 0), (0, Skp - Sk), (0, 0)))
        v4 = jnp.pad(v4, ((0, 0), (0, 0), (0, Skp - Sk), (0, 0)))
        if mask_i8 is None:
            mask_i8 = jnp.ones((B, Sq, Sk), jnp.int8)   # padded keys must be masked
    if mask_i8 is not None and (Sqp != Sq or Skp != Sk):
        mask_i8 = jnp.pad(mask_i8, ((0, 0), (0, Sqp - Sq), (0, Skp - Sk)))
    has_mask = mask_i8 is not None

    in_specs = [
        pl.BlockSpec((None, None, tq, d_k), lambda b, h, qi, ki: (b, h, qi, 0)),
        pl.BlockSpec((None, None, tk, d_k), lambda b, h, qi, ki: (b, h, ki, 0)),
        pl.BlockSpec((None, None, tk, d_v), lambda b, h, qi, ki: (b, h, ki, 0)),
    ]
    args = [q4, k4, v4]
    if has_mask:
        in_specs.append(pl.BlockSpec((None, tq, tk), lambda b, h, qi, ki: (b, qi, ki)))
        args.append(mask_i8)

    out = pl.pallas_call(
        functools.partial(_flash_attn_kernel, scale=scale, has_mask=has_mask),
        out_shape=jax.ShapeDtypeStruct((B, H, Sqp, d_v), q4.dtype),
        grid=(B, H, Sqp // tq, Skp // tk),
        in_specs=in_specs,
        out_specs=pl.BlockSpec((None, None, tq, d_v), lambda b, h, qi, ki: (b, h, qi, 0)),
        scratch_shapes=[pltpu.VMEM((tq, 1), jnp.float32),
                        pltpu.VMEM((tq, 1), jnp.float32),
                        pltpu.VMEM((tq, d_v), jnp.float32)],
        compiler_params=pltpu.CompilerParams(
            dimension_semantics=("parallel", "parallel", "parallel", "arbitrary")),
    )(*args)

    if Sqp != Sq:
        out = out[:, :, :Sq, :]
    return out


# ----------------------------------------------------------------------------
# Parameter initialization (bf16 weights in HBM, PyTorch-like shapes)
# ----------------------------------------------------------------------------

def _dense_init(key, fan_in, fan_out):
    kw, kb = jax.random.split(key)
    bound = 1.0 / math.sqrt(fan_in)
    return {
        "w": jax.random.uniform(kw, (fan_in, fan_out), jnp.float32,
                                -bound, bound).astype(jnp.bfloat16),
        "b": jax.random.uniform(kb, (fan_out,), jnp.float32,
                                -bound, bound).astype(jnp.bfloat16),
    }


def _ln_init(d):
    return {"g": jnp.ones((d,), jnp.bfloat16), "b": jnp.zeros((d,), jnp.bfloat16)}


def _attn_init(key, d_model, n_head, d_k, d_v, cross):
    if cross:
        k1, k2, k3 = jax.random.split(key, 3)
        return {"wq": _dense_init(k1, d_model, n_head * d_k),
                "wkv": _dense_init(k2, d_model, n_head * (d_k + d_v)),
                "wo": _dense_init(k3, n_head * d_v, d_model)}
    k1, k2 = jax.random.split(key)
    return {"wqkv": _dense_init(k1, d_model, n_head * (2 * d_k + d_v)),
            "wo": _dense_init(k2, n_head * d_v, d_model)}


def _sinusoidal_pe(max_seq_len, d_model):
    pos = jnp.arange(max_seq_len)[:, None].astype(jnp.float32)
    i = jnp.arange(d_model)[None, :]
    angle = pos / jnp.power(10000.0, (2 * (i // 2)).astype(jnp.float32) / d_model)
    return jnp.where(i % 2 == 0, jnp.sin(angle), jnp.cos(angle)).astype(jnp.float32)


def init_transformer_params(key, cfg):
    params = {}
    k_emb_s, k_emb_t, k_enc, k_dec, k_out = jax.random.split(key, 5)
    params["src_emb"] = jax.random.normal(
        k_emb_s, (cfg["src_vocab"], cfg["d_model"]), jnp.float32).astype(jnp.bfloat16)
    params["tgt_emb"] = jax.random.normal(
        k_emb_t, (cfg["tgt_vocab"], cfg["d_model"]), jnp.float32).astype(jnp.bfloat16)
    params["pe"] = _sinusoidal_pe(cfg["max_seq_len"], cfg["d_model"])

    def enc_layer(k):
        ka, kf1, kf2 = jax.random.split(k, 3)
        return {
            "attn": _attn_init(ka, cfg["d_model"], cfg["n_head"], cfg["d_k"],
                               cfg["d_v"], cross=False),
            "ln1": _ln_init(cfg["d_model"]),
            "ff1": _dense_init(kf1, cfg["d_model"], cfg["d_inner"]),
            "ff2": _dense_init(kf2, cfg["d_inner"], cfg["d_model"]),
            "ln2": _ln_init(cfg["d_model"]),
        }

    def dec_layer(k):
        ka, kc, kf1, kf2 = jax.random.split(k, 4)
        return {
            "self_attn": _attn_init(ka, cfg["d_model"], cfg["n_head"], cfg["d_k"],
                                    cfg["d_v"], cross=False),
            "ln1": _ln_init(cfg["d_model"]),
            "cross_attn": _attn_init(kc, cfg["d_model"], cfg["n_head"], cfg["d_k"],
                                     cfg["d_v"], cross=True),
            "ln2": _ln_init(cfg["d_model"]),
            "ff1": _dense_init(kf1, cfg["d_model"], cfg["d_inner"]),
            "ff2": _dense_init(kf2, cfg["d_inner"], cfg["d_model"]),
            "ln3": _ln_init(cfg["d_model"]),
        }

    params["encoder"] = [enc_layer(jax.random.fold_in(k_enc, i))
                         for i in range(cfg["n_layers"])]
    params["decoder"] = [dec_layer(jax.random.fold_in(k_dec, i))
                         for i in range(cfg["n_layers"])]
    params["out"] = _dense_init(k_out, cfg["d_model"], cfg["tgt_vocab"])
    return params


# ----------------------------------------------------------------------------
# Forward pass (glue in JAX, hot paths in Pallas)
# ----------------------------------------------------------------------------

def _prep_mask(mask, B, Sq, Sk):
    """Compact int8 keep-mask (1=attend, 0=masked); None stays None (no DMA)."""
    if mask is None:
        return None
    m = mask
    if m.ndim == 2:
        m = m[None]
    if m.ndim == 4:
        m = m[:, 0]   # TODO(synk): per-head masks collapsed; head dim must broadcast
    m = jnp.broadcast_to(m, (B, Sq, Sk))
    return (m != 0).astype(jnp.int8)


def multi_head_attention(p, x_q, x_kv, mask, cfg):
    B, Sq, D = x_q.shape
    Sk = x_kv.shape[1]
    H, d_k, d_v = cfg["n_head"], cfg["d_k"], cfg["d_v"]

    if "wqkv" in p:
        # Self-attention: single fused QKV projection (one pass over X).
        qkv = linear(x_q.reshape(B * Sq, D), p["wqkv"]["w"], p["wqkv"]["b"])
        q = qkv[:, :H * d_k]
        k = qkv[:, H * d_k:2 * H * d_k]
        v = qkv[:, 2 * H * d_k:]
    else:
        # Cross-attention: Q from decoder stream, fused KV from encoder stream
        # (weights stored split at init -> no runtime weight slicing).
        q = linear(x_q.reshape(B * Sq, D), p["wq"]["w"], p["wq"]["b"])
        kv = linear(x_kv.reshape(B * Sk, D), p["wkv"]["w"], p["wkv"]["b"])
        k = kv[:, :H * d_k]
        v = kv[:, H * d_k:]

    # Head-major layout for the head/KV-blocked flash kernel.
    # TODO(synk): this transpose is a JAX-level copy; folding it into the
    # projection's out BlockSpec needs d_k to be a 128 multiple.
    q4 = q.reshape(B, Sq, H, d_k).transpose(0, 2, 1, 3)
    k4 = k.reshape(B, Sk, H, d_k).transpose(0, 2, 1, 3)
    v4 = v.reshape(B, Sk, H, d_v).transpose(0, 2, 1, 3)

    mask_i8 = _prep_mask(mask, B, Sq, Sk)
    o4 = flash_attention(q4, k4, v4, mask_i8, 1.0 / math.sqrt(d_k))
    o = o4.transpose(0, 2, 1, 3).reshape(B * Sq, H * d_v)

    out = linear(o, p["wo"]["w"], p["wo"]["b"])
    return out.reshape(B, Sq, D)


def feed_forward(lp, x, cfg):
    B, S, D = x.shape
    o = feed_forward_fused(x.reshape(B * S, D),
                           lp["ff1"]["w"], lp["ff1"]["b"],
                           lp["ff2"]["w"], lp["ff2"]["b"])
    return o.reshape(B, S, D)


def _add_ln(x, y, ln):
    B, S, D = x.shape
    return add_layernorm(x.reshape(B * S, D), y.reshape(B * S, D),
                         ln["g"], ln["b"]).reshape(B, S, D)


def encoder(params, x, mask, cfg):
    # TODO(synk): dropout (p=0.1) is identity in eval mode; not applied here.
    for lp in params["encoder"]:
        a = multi_head_attention(lp["attn"], x, x, mask, cfg)
        x = _add_ln(x, a, lp["ln1"])
        f = feed_forward(lp, x, cfg)
        x = _add_ln(x, f, lp["ln2"])
    return x


def decoder(params, x, enc_out, tgt_mask, src_mask, cfg):
    for lp in params["decoder"]:
        a = multi_head_attention(lp["self_attn"], x, x, tgt_mask, cfg)
        x = _add_ln(x, a, lp["ln1"])
        c = multi_head_attention(lp["cross_attn"], x, enc_out, src_mask, cfg)
        x = _add_ln(x, c, lp["ln2"])
        f = feed_forward(lp, x, cfg)
        x = _add_ln(x, f, lp["ln3"])
    return (x,)  # reference decoder returns a tuple; caller uses dec_tgt[0]


def transformer_forward(params, src, tgt, cfg, src_mask=None, tgt_mask=None):
    B, Ss = src.shape
    _, St = tgt.shape
    # Embedding lookup is a gather -> plain JAX glue; activations flow as bf16.
    src_x = (jnp.take(params["src_emb"], src, axis=0).astype(jnp.float32)
             + params["pe"][:Ss][None]).astype(jnp.bfloat16)
    tgt_x = (jnp.take(params["tgt_emb"], tgt, axis=0).astype(jnp.float32)
             + params["pe"][:St][None]).astype(jnp.bfloat16)

    enc_src = encoder(params, src_x, src_mask, cfg)
    dec_tgt = decoder(params, tgt_x, enc_src, tgt_mask, src_mask, cfg)

    logits = linear(dec_tgt[0].reshape(B * St, cfg["d_model"]),
                    params["out"]["w"], params["out"]["b"],
                    out_dtype=jnp.float32)
    return logits.reshape(B, St, cfg["tgt_vocab"])


# ----------------------------------------------------------------------------
# Main
# ----------------------------------------------------------------------------

if __name__ == "__main__":
    cfg = dict(src_vocab=11, tgt_vocab=13, d_model=32, d_inner=64,
               n_layers=2, n_head=4, d_k=8, d_v=8, max_seq_len=16)

    key = jax.random.PRNGKey(0)
    kp, ks, kt = jax.random.split(key, 3)

    params = init_transformer_params(kp, cfg)

    B, S_src, S_tgt = 2, 8, 8
    src = jax.random.randint(ks, (B, S_src), 0, cfg["src_vocab"], dtype=jnp.int32)
    tgt = jax.random.randint(kt, (B, S_tgt), 0, cfg["tgt_vocab"], dtype=jnp.int32)
    causal = jnp.tril(jnp.ones((S_tgt, S_tgt), dtype=jnp.bool_))

    fwd = jax.jit(functools.partial(transformer_forward, cfg=cfg))

    out = jax.block_until_ready(fwd(params, src, tgt))                    # no-mask path
    out_m = jax.block_until_ready(fwd(params, src, tgt, tgt_mask=causal))  # masked path

    assert out.shape == (B, S_tgt, cfg["tgt_vocab"])
    assert out_m.shape == (B, S_tgt, cfg["tgt_vocab"])
    assert bool(jnp.all(jnp.isfinite(out)))
    assert bool(jnp.all(jnp.isfinite(out_m)))
    print("KERNEL_OK")
</pallas_src>

<mosaic_0001>
module attributes {stable_mosaic.version = 11 : i64} {
  func.func @_linear_kernel(%arg0: i32, %arg1: i32, %arg2: i32, %arg3: memref<16x32xbf16, #tpu.memory_space<vmem>>, %arg4: memref<32x96xbf16, #tpu.memory_space<vmem>>, %arg5: memref<1x96xbf16, #tpu.memory_space<vmem>>, %arg6: memref<16x96xbf16, #tpu.memory_space<vmem>>, %arg7: memref<16x96xf32, #tpu.memory_space<vmem>>) attributes {dimension_semantics = [#tpu.dimension_semantics<parallel>, #tpu.dimension_semantics<parallel>, #tpu.dimension_semantics<arbitrary>], iteration_bounds = array<i64: 1, 1, 1>, scalar_prefetch = 0 : i64, scratch_operands = 1 : i64, tpu.core_type = #tpu.core_type<tc>, window_params = [{transform_indices = @transform_0, window_bounds = array<i64: 16, 32>}, {transform_indices = @transform_1, window_bounds = array<i64: 32, 96>}, {transform_indices = @transform_2, window_bounds = array<i64: 1, 96>}, {transform_indices = @transform_3, window_bounds = array<i64: 16, 96>}]} {
    %c0_i32 = arith.constant 0 : i32
    %0 = arith.cmpi eq, %arg2, %c0_i32 : i32
    %1 = arith.extui %0 : i1 to i32
    %c0_i32_0 = arith.constant 0 : i32
    %2 = arith.cmpi ne, %1, %c0_i32_0 : i32
    scf.if %2 {
      %cst_10 = arith.constant 0.000000e+00 : f32
      %12 = vector.broadcast %cst_10 : f32 to vector<16x96xf32>
      %c0_11 = arith.constant 0 : index
      %c0_12 = arith.constant 0 : index
      %13 = vector.load %arg7[%c0_11, %c0_12] : memref<16x96xf32, #tpu.memory_space<vmem>>, vector<16x96xf32>
      tpu.vector_store %arg7[%c0_11, %c0_12], %12 {strides = array<i32>} : memref<16x96xf32, #tpu.memory_space<vmem>>, vector<16x96xf32>,
    } else {
    }
    %c0 = arith.constant 0 : index
    %c0_1 = arith.constant 0 : index
    %3 = vector.load %arg7[%c0, %c0_1] : memref<16x96xf32, #tpu.memory_space<vmem>>, vector<16x96xf32>
    %c0_2 = arith.constant 0 : index
    %c0_3 = arith.constant 0 : index
    %4 = vector.load %arg3[%c0_2, %c0_3] : memref<16x32xbf16, #tpu.memory_space<vmem>>, vector<16x32xbf16>
    %c0_4 = arith.constant 0 : index
    %c0_5 = arith.constant 0 : index
    %5 = vector.load %arg4[%c0_4, %c0_5] : memref<32x96xbf16, #tpu.memory_space<vmem>>, vector<32x96xbf16>
    %cst = arith.constant dense<0.000000e+00> : vector<16x96xf32>
    %6 = tpu.matmul %4, %5, %cst {dimension_numbers = #tpu.dot_dimension_numbers<[1], [0], [0], [1], [0, 0, 1, 1], [], []>} : vector<16x32xbf16>, vector<32x96xbf16>, vector<16x96xf32> -> vector<16x96xf32>
    %7 = arith.addf %3, %6 : vector<16x96xf32>
    %c0_6 = arith.constant 0 : index
    %c0_7 = arith.constant 0 : index
    %8 = vector.load %arg7[%c0_6, %c0_7] : memref<16x96xf32, #tpu.memory_space<vmem>>, vector<16x96xf32>
    tpu.vector_store %arg7[%c0_6, %c0_7], %7 {strides = array<i32>} : memref<16x96xf32, #tpu.memory_space<vmem>>, vector<16x96xf32>,
    %c0_i32_8 = arith.constant 0 : i32
    %9 = arith.cmpi eq, %arg2, %c0_i32_8 : i32
    %10 = arith.extui %9 : i1 to i32
    %c0_i32_9 = arith.constant 0 : i32
    %11 = arith.cmpi ne, %10, %c0_i32_9 : i32
    scf.if %11 {
      %c0_10 = arith.constant 0 : index
      %c0_11 = arith.constant 0 : index
      %12 = vector.load %arg7[%c0_10, %c0_11] : memref<16x96xf32, #tpu.memory_space<vmem>>, vector<16x96xf32>
      %c0_12 = arith.constant 0 : index
      %c0_13 = arith.constant 0 : index
      %13 = vector.load %arg5[%c0_12, %c0_13] : memref<1x96xbf16, #tpu.memory_space<vmem>>, vector<1x96xbf16>
      %14 = arith.extf %13 : vector<1x96xbf16> to vector<1x96xf32>
      %15 = vector.broadcast %14 : vector<1x96xf32> to vector<16x96xf32>
      %16 = arith.addf %12, %15 : vector<16x96xf32>
      %17 = arith.truncf %16 : vector<16x96xf32> to vector<16x96xbf16>
      %c0_14 = arith.constant 0 : index
      %c0_15 = arith.constant 0 : index
      %18 = vector.load %arg6[%c0_14, %c0_15] : memref<16x96xbf16, #tpu.memory_space<vmem>>, vector<16x96xbf16>
      tpu.vector_store %arg6[%c0_14, %c0_15], %17 {strides = array<i32>} : memref<16x96xbf16, #tpu.memory_space<vmem>>, vector<16x96xbf16>,
    } else {
    }
    return
  }
  func.func @transform_0(%arg0: i32, %arg1: i32, %arg2: i32) -> (i32, i32) {
    %c0_i32 = arith.constant 0 : i32
    return %arg0, %arg2 : i32, i32
  }
  func.func @transform_1(%arg0: i32, %arg1: i32, %arg2: i32) -> (i32, i32) {
    %c0_i32 = arith.constant 0 : i32
    return %arg2, %arg1 : i32, i32
  }
  func.func @transform_2(%arg0: i32, %arg1: i32, %arg2: i32) -> (i32, i32) {
    %c0_i32 = arith.constant 0 : i32
    %c0_i32_0 = arith.constant 0 : i32
    return %c0_i32, %arg1 : i32, i32
  }
  func.func @transform_3(%arg0: i32, %arg1: i32, %arg2: i32) -> (i32, i32) {
    %c0_i32 = arith.constant 0 : i32
    return %arg0, %arg1 : i32, i32
  }
}

module attributes {stable_mosaic.version = 11 : i64} {
  func.func @_flash_attn_kernel(%arg0: i32, %arg1: i32, %arg2: i32, %arg3: i32, %arg4: memref<1x1x8x8xbf16, #tpu.memory_space<vmem>>, %arg5: memref<1x1x8x8xbf16, #tpu.memory_space<vmem>>, %arg6: memref<1x1x8x8xbf16, #tpu.memory_space<vmem>>, %arg7: memref<1x1x8x8xbf16, #tpu.memory_space<vmem>>, %arg8: memref<8x1xf32, #tpu.memory_space<vmem>>, %arg9: memref<8x1xf32, #tpu.memory_space<vmem>>, %arg10: memref<8x8xf32, #tpu.memory_space<vmem>>) attributes {dimension_semantics = [#tpu.dimension_semantics<parallel>, #tpu.dimension_semantics<parallel>, #tpu.dimension_semantics<parallel>, #tpu.dimension_semantics<arbitrary>], iteration_bounds = array<i64: 2, 4, 1, 1>, scalar_prefetch = 0 : i64, scratch_operands = 3 : i64, tpu.core_type = #tpu.core_type<tc>, window_params = [{transform_indices = @transform_0, window_bounds = array<i64: 1, 1, 8, 8>}, {transform_indices = @transform_1, window_bounds = array<i64: 1, 1, 8, 8>}, {transform_indices = @transform_2, window_bounds = array<i64: 1, 1, 8, 8>}, {transform_indices = @transform_3, window_bounds = array<i64: 1, 1, 8, 8>}]} {
    %c0_i32 = arith.constant 0 : i32
    %0 = arith.cmpi eq, %arg3, %c0_i32 : i32
    %1 = arith.extui %0 : i1 to i32
    %c0_i32_0 = arith.constant 0 : i32
    %2 = arith.cmpi ne, %1, %c0_i32_0 : i32
    scf.if %2 {
      %cst_30 = arith.constant -1.000000e+30 : f32
      %40 = vector.broadcast %cst_30 : f32 to vector<8x1xf32>
      %c0_31 = arith.constant 0 : index
      %c0_32 = arith.constant 0 : index
      %41 = vector.load %arg8[%c0_31, %c0_32] : memref<8x1xf32, #tpu.memory_space<vmem>>, vector<8x1xf32>
      tpu.vector_store %arg8[%c0_31, %c0_32], %40 {strides = array<i32>} : memref<8x1xf32, #tpu.memory_space<vmem>>, vector<8x1xf32>,
      %cst_33 = arith.constant 0.000000e+00 : f32
      %42 = vector.broadcast %cst_33 : f32 to vector<8x1xf32>
      %c0_34 = arith.constant 0 : index
      %c0_35 = arith.constant 0 : index
      %43 = vector.load %arg9[%c0_34, %c0_35] : memref<8x1xf32, #tpu.memory_space<vmem>>, vector<8x1xf32>
      tpu.vector_store %arg9[%c0_34, %c0_35], %42 {strides = array<i32>} : memref<8x1xf32, #tpu.memory_space<vmem>>, vector<8x1xf32>,
      %cst_36 = arith.constant 0.000000e+00 : f32
      %44 = vector.broadcast %cst_36 : f32 to vector<8x8xf32>
      %c0_37 = arith.constant 0 : index
      %c0_38 = arith.constant 0 : index
      %45 = vector.load %arg10[%c0_37, %c0_38] : memref<8x8xf32, #tpu.memory_space<vmem>>, vector<8x8xf32>
      tpu.vector_store %arg10[%c0_37, %c0_38], %44 {strides = array<i32>} : memref<8x8xf32, #tpu.memory_space<vmem>>, vector<8x8xf32>,
    } else {
    }
    %c0 = arith.constant 0 : index
    %c0_1 = arith.constant 0 : index
    %c0_2 = arith.constant 0 : index
    %c0_3 = arith.constant 0 : index
    %3 = vector.load %arg4[%c0, %c0_1, %c0_2, %c0_3] : memref<1x1x8x8xbf16, #tpu.memory_space<vmem>>, vector<1x1x8x8xbf16>
    %4 = vector.shape_cast %3 : vector<1x1x8x8xbf16> to vector<8x8xbf16>
    %5 = arith.extf %4 : vector<8x8xbf16> to vector<8x8xf32>
    %cst = arith.constant 0.353553385 : f32
    %6 = vector.broadcast %cst : f32 to vector<8x8xf32>
    %7 = arith.mulf %5, %6 : vector<8x8xf32>
    %8 = arith.truncf %7 : vector<8x8xf32> to vector<8x8xbf16>
    %c0_4 = arith.constant 0 : index
    %c0_5 = arith.constant 0 : index
    %c0_6 = arith.constant 0 : index
    %c0_7 = arith.constant 0 : index
    %9 = vector.load %arg5[%c0_4, %c0_5, %c0_6, %c0_7] : memref<1x1x8x8xbf16, #tpu.memory_space<vmem>>, vector<1x1x8x8xbf16>
    %10 = vector.shape_cast %9 : vector<1x1x8x8xbf16> to vector<8x8xbf16>
    %c0_8 = arith.constant 0 : index
    %c0_9 = arith.constant 0 : index
    %c0_10 = arith.constant 0 : index
    %c0_11 = arith.constant 0 : index
    %11 = vector.load %arg6[%c0_8, %c0_9, %c0_10, %c0_11] : memref<1x1x8x8xbf16, #tpu.memory_space<vmem>>, vector<1x1x8x8xbf16>
    %12 = vector.shape_cast %11 : vector<1x1x8x8xbf16> to vector<8x8xbf16>
    %cst_12 = arith.constant dense<0.000000e+00> : vector<8x8xf32>
    %13 = tpu.matmul %8, %10, %cst_12 {dimension_numbers = #tpu.dot_dimension_numbers<[1], [1], [0], [0], [0, 0, 1, 0], [], []>} : vector<8x8xbf16>, vector<8x8xbf16>, vector<8x8xf32> -> vector<8x8xf32>
    %c0_13 = arith.constant 0 : index
    %c0_14 = arith.constant 0 : index
    %14 = vector.load %arg8[%c0_13, %c0_14] : memref<8x1xf32, #tpu.memory_space<vmem>>, vector<8x1xf32>
    %cst_15 = arith.constant dense<0xFF800000> : vector<8xf32>
    %15 = vector.multi_reduction <maximumf>, %13, %cst_15 [1] : vector<8x8xf32> to vector<8xf32>
    %16 = vector.shape_cast %15 : vector<8xf32> to vector<8x1xf32>
    %17 = arith.maximumf %14, %16 : vector<8x1xf32>
    %18 = arith.subf %14, %17 : vector<8x1xf32>
    %19 = math.exp %18 : vector<8x1xf32>
    %20 = vector.broadcast %17 : vector<8x1xf32> to vector<8x8xf32>
    %21 = arith.subf %13, %20 : vector<8x8xf32>
    %22 = math.exp %21 : vector<8x8xf32>
    %c0_16 = arith.constant 0 : index
    %c0_17 = arith.constant 0 : index
    %23 = vector.load %arg9[%c0_16, %c0_17] : memref<8x1xf32, #tpu.memory_space<vmem>>, vector<8x1xf32>
    %24 = arith.mulf %19, %23 : vector<8x1xf32>
    %cst_18 = arith.constant dense<0.000000e+00> : vector<8xf32>
    %25 = vector.multi_reduction <add>, %22, %cst_18 [1] : vector<8x8xf32> to vector<8xf32>
    %26 = vector.shape_cast %25 : vector<8xf32> to vector<8x1xf32>
    %27 = arith.addf %24, %26 : vector<8x1xf32>
    %c0_19 = arith.constant 0 : index
    %c0_20 = arith.constant 0 : index
    %28 = vector.load %arg9[%c0_19, %c0_20] : memref<8x1xf32, #tpu.memory_space<vmem>>, vector<8x1xf32>
    tpu.vector_store %arg9[%c0_19, %c0_20], %27 {strides = array<i32>} : memref<8x1xf32, #tpu.memory_space<vmem>>, vector<8x1xf32>,
    %c0_21 = arith.constant 0 : index
    %c0_22 = arith.constant 0 : index
    %29 = vector.load %arg10[%c0_21, %c0_22] : memref<8x8xf32, #tpu.memory_space<vmem>>, vector<8x8xf32>
    %30 = vector.broadcast %19 : vector<8x1xf32> to vector<8x8xf32>
    %31 = arith.mulf %30, %29 : vector<8x8xf32>
    %32 = arith.truncf %22 : vector<8x8xf32> to vector<8x8xbf16>
    %cst_23 = arith.constant dense<0.000000e+00> : vector<8x8xf32>
    %33 = tpu.matmul %32, %12, %cst_23 {dimension_numbers = #tpu.dot_dimension_numbers<[1], [0], [0], [1], [0, 0, 1, 1], [], []>} : vector<8x8xbf16>, vector<8x8xbf16>, vector<8x8xf32> -> vector<8x8xf32>
    %34 = arith.addf %31, %33 : vector<8x8xf32>
    %c0_24 = arith.constant 0 : index
    %c0_25 = arith.constant 0 : index
    %35 = vector.load %arg10[%c0_24, %c0_25] : memref<8x8xf32, #tpu.memory_space<vmem>>, vector<8x8xf32>
    tpu.vector_store %arg10[%c0_24, %c0_25], %34 {strides = array<i32>} : memref<8x8xf32, #tpu.memory_space<vmem>>, vector<8x8xf32>,
    %c0_26 = arith.constant 0 : index
    %c0_27 = arith.constant 0 : index
    %36 = vector.load %arg8[%c0_26, %c0_27] : memref<8x1xf32, #tpu.memory_space<vmem>>, vector<8x1xf32>
    tpu.vector_store %arg8[%c0_26, %c0_27], %17 {strides = array<i32>} : memref<8x1xf32, #tpu.memory_space<vmem>>, vector<8x1xf32>,
    %c0_i32_28 = arith.constant 0 : i32
    %37 = arith.cmpi eq, %arg3, %c0_i32_28 : i32
    %38 = arith.extui %37 : i1 to i32
    %c0_i32_29 = arith.constant 0 : i32
    %39 = arith.cmpi ne, %38, %c0_i32_29 : i32
    scf.if %39 {
      %c0_30 = arith.constant 0 : index
      %c0_31 = arith.constant 0 : index
      %40 = vector.load %arg9[%c0_30, %c0_31] : memref<8x1xf32, #tpu.memory_space<vmem>>, vector<8x1xf32>
      %cst_32 = arith.constant 1.000000e-30 : f32
      %41 = vector.broadcast %cst_32 : f32 to vector<8x1xf32>
      %42 = arith.maximumf %40, %41 : vector<8x1xf32>
      %c0_33 = arith.constant 0 : index
      %c0_34 = arith.constant 0 : index
      %43 = vector.load %arg10[%c0_33, %c0_34] : memref<8x8xf32, #tpu.memory_space<vmem>>, vector<8x8xf32>
      %44 = tpu.reciprocal %42 {approx = true} : vector<8x1xf32> -> vector<8x1xf32>
      %45 = vector.broadcast %44 : vector<8x1xf32> to vector<8x8xf32>
      %46 = arith.mulf %43, %45 : vector<8x8xf32>
      %47 = arith.truncf %46 : vector<8x8xf32> to vector<8x8xbf16>
      %c0_35 = arith.constant 0 : index
      %c0_36 = arith.constant 0 : index
      %c0_37 = arith.constant 0 : index
      %c0_38 = arith.constant 0 : index
      %48 = vector.load %arg7[%c0_35, %c0_36, %c0_37, %c0_38] : memref<1x1x8x8xbf16, #tpu.memory_space<vmem>>, vector<1x1x8x8xbf16>
      %49 = vector.shape_cast %48 : vector<1x1x8x8xbf16> to vector<8x8xbf16>
      %50 = vector.shape_cast %47 : vector<8x8xbf16> to vector<1x1x8x8xbf16>
      tpu.vector_store %arg7[%c0_35, %c0_36, %c0_37, %c0_38], %50 {strides = array<i32>} : memref<1x1x8x8xbf16, #tpu.memory_space<vmem>>, vector<1x1x8x8xbf16>,
    } else {
    }
    return
  }
  func.func @transform_0(%arg0: i32, %arg1: i32, %arg2: i32, %arg3: i32) -> (i32, i32, i32, i32) {
    %c0_i32 = arith.constant 0 : i32
    %c0_i32_0 = arith.constant 0 : i32
    return %arg0, %arg1, %arg2, %c0_i32 : i32, i32, i32, i32
  }
  func.func @transform_1(%arg0: i32, %arg1: i32, %arg2: i32, %arg3: i32) -> (i32, i32, i32, i32) {
    %c0_i32 = arith.constant 0 : i32
    %c0_i32_0 = arith.constant 0 : i32
    return %arg0, %arg1, %arg3, %c0_i32 : i32, i32, i32, i32
  }
  func.func @transform_2(%arg0: i32, %arg1: i32, %arg2: i32, %arg3: i32) -> (i32, i32, i32, i32) {
    %c0_i32 = arith.constant 0 : i32
    %c0_i32_0 = arith.constant 0 : i32
    return %arg0, %arg1, %arg3, %c0_i32 : i32, i32, i32, i32
  }
  func.func @transform_3(%arg0: i32, %arg1: i32, %arg2: i32, %arg3: i32) -> (i32, i32, i32, i32) {
    %c0_i32 = arith.constant 0 : i32
    %c0_i32_0 = arith.constant 0 : i32
    return %arg0, %arg1, %arg2, %c0_i32 : i32, i32, i32, i32
  }
}

module attributes {stable_mosaic.version = 11 : i64} {
  func.func @_add_ln_kernel(%arg0: i32, %arg1: memref<16x32xbf16, #tpu.memory_space<vmem>>, %arg2: memref<16x32xbf16, #tpu.memory_space<vmem>>, %arg3: memref<1x32xbf16, #tpu.memory_space<vmem>>, %arg4: memref<1x32xbf16, #tpu.memory_space<vmem>>, %arg5: memref<16x32xbf16, #tpu.memory_space<vmem>>) attributes {dimension_semantics = [#tpu.dimension_semantics<parallel>], iteration_bounds = array<i64: 1>, scalar_prefetch = 0 : i64, scratch_operands = 0 : i64, tpu.core_type = #tpu.core_type<tc>, window_params = [{transform_indices = @transform_0, window_bounds = array<i64: 16, 32>}, {transform_indices = @transform_1, window_bounds = array<i64: 16, 32>}, {pipeline_mode = #tpu.pipeline_mode<synchronous>, transform_indices = @transform_2, window_bounds = array<i64: 1, 32>}, {pipeline_mode = #tpu.pipeline_mode<synchronous>, transform_indices = @transform_3, window_bounds = array<i64: 1, 32>}, {transform_indices = @transform_4, window_bounds = array<i64: 16, 32>}]} {
    %c0 = arith.constant 0 : index
    %c0_0 = arith.constant 0 : index
    %0 = vector.load %arg1[%c0, %c0_0] : memref<16x32xbf16, #tpu.memory_space<vmem>>, vector<16x32xbf16>
    %1 = arith.extf %0 : vector<16x32xbf16> to vector<16x32xf32>
    %c0_1 = arith.constant 0 : index
    %c0_2 = arith.constant 0 : index
    %2 = vector.load %arg2[%c0_1, %c0_2] : memref<16x32xbf16, #tpu.memory_space<vmem>>, vector<16x32xbf16>
    %3 = arith.extf %2 : vector<16x32xbf16> to vector<16x32xf32>
    %4 = arith.addf %1, %3 : vector<16x32xf32>
    %cst = arith.constant dense<0.000000e+00> : vector<16xf32>
    %5 = vector.multi_reduction <add>, %4, %cst [1] : vector<16x32xf32> to vector<16xf32>
    %6 = vector.shape_cast %5 : vector<16xf32> to vector<16x1xf32>
    %cst_3 = arith.constant 3.200000e+01 : f32
    %7 = vector.broadcast %cst_3 : f32 to vector<16x1xf32>
    %8 = arith.divf %6, %7 : vector<16x1xf32>
    %9 = vector.broadcast %8 : vector<16x1xf32> to vector<16x32xf32>
    %10 = arith.subf %4, %9 : vector<16x32xf32>
    %11 = arith.mulf %10, %10 : vector<16x32xf32>
    %cst_4 = arith.constant dense<0.000000e+00> : vector<16xf32>
    %12 = vector.multi_reduction <add>, %11, %cst_4 [1] : vector<16x32xf32> to vector<16xf32>
    %13 = vector.shape_cast %12 : vector<16xf32> to vector<16x1xf32>
    %cst_5 = arith.constant 3.200000e+01 : f32
    %14 = vector.broadcast %cst_5 : f32 to vector<16x1xf32>
    %15 = arith.divf %13, %14 : vector<16x1xf32>
    %cst_6 = arith.constant 9.99999974E-6 : f32
    %16 = vector.broadcast %cst_6 : f32 to vector<16x1xf32>
    %17 = arith.addf %15, %16 : vector<16x1xf32>
    %18 = math.rsqrt %17 : vector<16x1xf32>
    %19 = vector.broadcast %18 : vector<16x1xf32> to vector<16x32xf32>
    %20 = arith.mulf %10, %19 : vector<16x32xf32>
    %c0_7 = arith.constant 0 : index
    %c0_8 = arith.constant 0 : index
    %21 = vector.load %arg3[%c0_7, %c0_8] : memref<1x32xbf16, #tpu.memory_space<vmem>>, vector<1x32xbf16>
    %22 = arith.extf %21 : vector<1x32xbf16> to vector<1x32xf32>
    %23 = vector.broadcast %22 : vector<1x32xf32> to vector<16x32xf32>
    %24 = arith.mulf %20, %23 : vector<16x32xf32>
    %c0_9 = arith.constant 0 : index
    %c0_10 = arith.constant 0 : index
    %25 = vector.load %arg4[%c0_9, %c0_10] : memref<1x32xbf16, #tpu.memory_space<vmem>>, vector<1x32xbf16>
    %26 = arith.extf %25 : vector<1x32xbf16> to vector<1x32xf32>
    %27 = vector.broadcast %26 : vector<1x32xf32> to vector<16x32xf32>
    %28 = arith.addf %24, %27 : vector<16x32xf32>
    %29 = arith.truncf %28 : vector<16x32xf32> to vector<16x32xbf16>
    %c0_11 = arith.constant 0 : index
    %c0_12 = arith.constant 0 : index
    %30 = vector.load %arg5[%c0_11, %c0_12] : memref<16x32xbf16, #tpu.memory_space<vmem>>, vector<16x32xbf16>
    tpu.vector_store %arg5[%c0_11, %c0_12], %29 {strides = array<i32>} : memref<16x32xbf16, #tpu.memory_space<vmem>>, vector<16x32xbf16>,
    return
  }
  func.func @transform_0(%arg0: i32) -> (i32, i32) {
    %c0_i32 = arith.constant 0 : i32
    %c0_i32_0 = arith.constant 0 : i32
    return %arg0, %c0_i32 : i32, i32
  }
  func.func @transform_1(%arg0: i32) -> (i32, i32) {
    %c0_i32 = arith.constant 0 : i32
    %c0_i32_0 = arith.constant 0 : i32
    return %arg0, %c0_i32 : i32, i32
  }
  func.func @transform_2(%arg0: i32) -> (i32, i32) {
    %c0_i32 = arith.constant 0 : i32
    %c0_i32_0 = arith.constant 0 : i32
    %c0_i32_1 = arith.constant 0 : i32
    return %c0_i32, %c0_i32_0 : i32, i32
  }
  func.func @transform_3(%arg0: i32) -> (i32, i32) {
    %c0_i32 = arith.constant 0 : i32
    %c0_i32_0 = arith.constant 0 : i32
    %c0_i32_1 = arith.constant 0 : i32
    return %c0_i32, %c0_i32_0 : i32, i32
  }
  func.func @transform_4(%arg0: i32) -> (i32, i32) {
    %c0_i32 = arith.constant 0 : i32
    %c0_i32_0 = arith.constant 0 : i32
    return %arg0, %c0_i32 : i32, i32
  }
}

module attributes {stable_mosaic.version = 11 : i64} {
  func.func @_linear_kernel(%arg0: i32, %arg1: i32, %arg2: i32, %arg3: memref<16x32xbf16, #tpu.memory_space<vmem>>, %arg4: memref<32x32xbf16, #tpu.memory_space<vmem>>, %arg5: memref<1x32xbf16, #tpu.memory_space<vmem>>, %arg6: memref<16x32xbf16, #tpu.memory_space<vmem>>, %arg7: memref<16x32xf32, #tpu.memory_space<vmem>>) attributes {dimension_semantics = [#tpu.dimension_semantics<parallel>, #tpu.dimension_semantics<parallel>, #tpu.dimension_semantics<arbitrary>], iteration_bounds = array<i64: 1, 1, 1>, scalar_prefetch = 0 : i64, scratch_operands = 1 : i64, tpu.core_type = #tpu.core_type<tc>, window_params = [{transform_indices = @transform_0, window_bounds = array<i64: 16, 32>}, {transform_indices = @transform_1, window_bounds = array<i64: 32, 32>}, {transform_indices = @transform_2, window_bounds = array<i64: 1, 32>}, {transform_indices = @transform_3, window_bounds = array<i64: 16, 32>}]} {
    %c0_i32 = arith.constant 0 : i32
    %0 = arith.cmpi eq, %arg2, %c0_i32 : i32
    %1 = arith.extui %0 : i1 to i32
    %c0_i32_0 = arith.constant 0 : i32
    %2 = arith.cmpi ne, %1, %c0_i32_0 : i32
    scf.if %2 {
      %cst_10 = arith.constant 0.000000e+00 : f32
      %12 = vector.broadcast %cst_10 : f32 to vector<16x32xf32>
      %c0_11 = arith.constant 0 : index
      %c0_12 = arith.constant 0 : index
      %13 = vector.load %arg7[%c0_11, %c0_12] : memref<16x32xf32, #tpu.memory_space<vmem>>, vector<16x32xf32>
      tpu.vector_store %arg7[%c0_11, %c0_12], %12 {strides = array<i32>} : memref<16x32xf32, #tpu.memory_space<vmem>>, vector<16x32xf32>,
    } else {
    }
    %c0 = arith.constant 0 : index
    %c0_1 = arith.constant 0 : index
    %3 = vector.load %arg7[%c0, %c0_1] : memref<16x32xf32, #tpu.memory_space<vmem>>, vector<16x32xf32>
    %c0_2 = arith.constant 0 : index
    %c0_3 = arith.constant 0 : index
    %4 = vector.load %arg3[%c0_2, %c0_3] : memref<16x32xbf16, #tpu.memory_space<vmem>>, vector<16x32xbf16>
    %c0_4 = arith.constant 0 : index
    %c0_5 = arith.constant 0 : index
    %5 = vector.load %arg4[%c0_4, %c0_5] : memref<32x32xbf16, #tpu.memory_space<vmem>>, vector<32x32xbf16>
    %cst = arith.constant dense<0.000000e+00> : vector<16x32xf32>
    %6 = tpu.matmul %4, %5, %cst {dimension_numbers = #tpu.dot_dimension_numbers<[1], [0], [0], [1], [0, 0, 1, 1], [], []>} : vector<16x32xbf16>, vector<32x32xbf16>, vector<16x32xf32> -> vector<16x32xf32>
    %7 = arith.addf %3, %6 : vector<16x32xf32>
    %c0_6 = arith.constant 0 : index
    %c0_7 = arith.constant 0 : index
    %8 = vector.load %arg7[%c0_6, %c0_7] : memref<16x32xf32, #tpu.memory_space<vmem>>, vector<16x32xf32>
    tpu.vector_store %arg7[%c0_6, %c0_7], %7 {strides = array<i32>} : memref<16x32xf32, #tpu.memory_space<vmem>>, vector<16x32xf32>,
    %c0_i32_8 = arith.constant 0 : i32
    %9 = arith.cmpi eq, %arg2, %c0_i32_8 : i32
    %10 = arith.extui %9 : i1 to i32
    %c0_i32_9 = arith.constant 0 : i32
    %11 = arith.cmpi ne, %10, %c0_i32_9 : i32
    scf.if %11 {
      %c0_10 = arith.constant 0 : index
      %c0_11 = arith.constant 0 : index
      %12 = vector.load %arg7[%c0_10, %c0_11] : memref<16x32xf32, #tpu.memory_space<vmem>>, vector<16x32xf32>
      %c0_12 = arith.constant 0 : index
      %c0_13 = arith.constant 0 : index
      %13 = vector.load %arg5[%c0_12, %c0_13] : memref<1x32xbf16, #tpu.memory_space<vmem>>, vector<1x32xbf16>
      %14 = arith.extf %13 : vector<1x32xbf16> to vector<1x32xf32>
      %15 = vector.broadcast %14 : vector<1x32xf32> to vector<16x32xf32>
      %16 = arith.addf %12, %15 : vector<16x32xf32>
      %17 = arith.truncf %16 : vector<16x32xf32> to vector<16x32xbf16>
      %c0_14 = arith.constant 0 : index
      %c0_15 = arith.constant 0 : index
      %18 = vector.load %arg6[%c0_14, %c0_15] : memref<16x32xbf16, #tpu.memory_space<vmem>>, vector<16x32xbf16>
      tpu.vector_store %arg6[%c0_14, %c0_15], %17 {strides = array<i32>} : memref<16x32xbf16, #tpu.memory_space<vmem>>, vector<16x32xbf16>,
    } else {
    }
    return
  }
  func.func @transform_0(%arg0: i32, %arg1: i32, %arg2: i32) -> (i32, i32) {
    %c0_i32 = arith.constant 0 : i32
    return %arg0, %arg2 : i32, i32
  }
  func.func @transform_1(%arg0: i32, %arg1: i32, %arg2: i32) -> (i32, i32) {
    %c0_i32 = arith.constant 0 : i32
    return %arg2, %arg1 : i32, i32
  }
  func.func @transform_2(%arg0: i32, %arg1: i32, %arg2: i32) -> (i32, i32) {
    %c0_i32 = arith.constant 0 : i32
    %c0_i32_0 = arith.constant 0 : i32
    return %c0_i32, %arg1 : i32, i32
  }
  func.func @transform_3(%arg0: i32, %arg1: i32, %arg2: i32) -> (i32, i32) {
    %c0_i32 = arith.constant 0 : i32
    return %arg0, %arg1 : i32, i32
  }
}

module attributes {stable_mosaic.version = 11 : i64} {
  func.func @_ffn_kernel(%arg0: i32, %arg1: i32, %arg2: memref<16x32xbf16, #tpu.memory_space<vmem>>, %arg3: memref<32x64xbf16, #tpu.memory_space<vmem>>, %arg4: memref<1x64xbf16, #tpu.memory_space<vmem>>, %arg5: memref<64x32xbf16, #tpu.memory_space<vmem>>, %arg6: memref<1x32xbf16, #tpu.memory_space<vmem>>, %arg7: memref<16x32xbf16, #tpu.memory_space<vmem>>, %arg8: memref<16x32xf32, #tpu.memory_space<vmem>>) attributes {dimension_semantics = [#tpu.dimension_semantics<parallel>, #tpu.dimension_semantics<arbitrary>], iteration_bounds = array<i64: 1, 1>, scalar_prefetch = 0 : i64, scratch_operands = 1 : i64, tpu.core_type = #tpu.core_type<tc>, window_params = [{transform_indices = @transform_0, window_bounds = array<i64: 16, 32>}, {transform_indices = @transform_1, window_bounds = array<i64: 32, 64>}, {transform_indices = @transform_2, window_bounds = array<i64: 1, 64>}, {transform_indices = @transform_3, window_bounds = array<i64: 64, 32>}, {pipeline_mode = #tpu.pipeline_mode<synchronous>, transform_indices = @transform_4, window_bounds = array<i64: 1, 32>}, {transform_indices = @transform_5, window_bounds = array<i64: 16, 32>}]} {
    %c0_i32 = arith.constant 0 : i32
    %0 = arith.cmpi eq, %arg1, %c0_i32 : i32
    %1 = arith.extui %0 : i1 to i32
    %c0_i32_0 = arith.constant 0 : i32
    %2 = arith.cmpi ne, %1, %c0_i32_0 : i32
    scf.if %2 {
      %cst_16 = arith.constant 0.000000e+00 : f32
      %21 = vector.broadcast %cst_16 : f32 to vector<16x32xf32>
      %c0_17 = arith.constant 0 : index
      %c0_18 = arith.constant 0 : index
      %22 = vector.load %arg8[%c0_17, %c0_18] : memref<16x32xf32, #tpu.memory_space<vmem>>, vector<16x32xf32>
      tpu.vector_store %arg8[%c0_17, %c0_18], %21 {strides = array<i32>} : memref<16x32xf32, #tpu.memory_space<vmem>>, vector<16x32xf32>,
    } else {
    }
    %c0 = arith.constant 0 : index
    %c0_1 = arith.constant 0 : index
    %3 = vector.load %arg2[%c0, %c0_1] : memref<16x32xbf16, #tpu.memory_space<vmem>>, vector<16x32xbf16>
    %c0_2 = arith.constant 0 : index
    %c0_3 = arith.constant 0 : index
    %4 = vector.load %arg3[%c0_2, %c0_3] : memref<32x64xbf16, #tpu.memory_space<vmem>>, vector<32x64xbf16>
    %cst = arith.constant dense<0.000000e+00> : vector<16x64xf32>
    %5 = tpu.matmul %3, %4, %cst {dimension_numbers = #tpu.dot_dimension_numbers<[1], [0], [0], [1], [0, 0, 1, 1], [], []>} : vector<16x32xbf16>, vector<32x64xbf16>, vector<16x64xf32> -> vector<16x64xf32>
    %c0_4 = arith.constant 0 : index
    %c0_5 = arith.constant 0 : index
    %6 = vector.load %arg4[%c0_4, %c0_5] : memref<1x64xbf16, #tpu.memory_space<vmem>>, vector<1x64xbf16>
    %7 = arith.extf %6 : vector<1x64xbf16> to vector<1x64xf32>
    %8 = vector.broadcast %7 : vector<1x64xf32> to vector<16x64xf32>
    %9 = arith.addf %5, %8 : vector<16x64xf32>
    %cst_6 = arith.constant 0.000000e+00 : f32
    %10 = vector.broadcast %cst_6 : f32 to vector<16x64xf32>
    %11 = arith.maximumf %9, %10 : vector<16x64xf32>
    %c0_7 = arith.constant 0 : index
    %c0_8 = arith.constant 0 : index
    %12 = vector.load %arg8[%c0_7, %c0_8] : memref<16x32xf32, #tpu.memory_space<vmem>>, vector<16x32xf32>
    %13 = arith.truncf %11 : vector<16x64xf32> to vector<16x64xbf16>
    %c0_9 = arith.constant 0 : index
    %c0_10 = arith.constant 0 : index
    %14 = vector.load %arg5[%c0_9, %c0_10] : memref<64x32xbf16, #tpu.memory_space<vmem>>, vector<64x32xbf16>
    %cst_11 = arith.constant dense<0.000000e+00> : vector<16x32xf32>
    %15 = tpu.matmul %13, %14, %cst_11 {dimension_numbers = #tpu.dot_dimension_numbers<[1], [0], [0], [1], [0, 0, 1, 1], [], []>} : vector<16x64xbf16>, vector<64x32xbf16>, vector<16x32xf32> -> vector<16x32xf32>
    %16 = arith.addf %12, %15 : vector<16x32xf32>
    %c0_12 = arith.constant 0 : index
    %c0_13 = arith.constant 0 : index
    %17 = vector.load %arg8[%c0_12, %c0_13] : memref<16x32xf32, #tpu.memory_space<vmem>>, vector<16x32xf32>
    tpu.vector_store %arg8[%c0_12, %c0_13], %16 {strides = array<i32>} : memref<16x32xf32, #tpu.memory_space<vmem>>, vector<16x32xf32>,
    %c0_i32_14 = arith.constant 0 : i32
    %18 = arith.cmpi eq, %arg1, %c0_i32_14 : i32
    %19 = arith.extui %18 : i1 to i32
    %c0_i32_15 = arith.constant 0 : i32
    %20 = arith.cmpi ne, %19, %c0_i32_15 : i32
    scf.if %20 {
      %c0_16 = arith.constant 0 : index
      %c0_17 = arith.constant 0 : index
      %21 = vector.load %arg8[%c0_16, %c0_17] : memref<16x32xf32, #tpu.memory_space<vmem>>, vector<16x32xf32>
      %c0_18 = arith.constant 0 : index
      %c0_19 = arith.constant 0 : index
      %22 = vector.load %arg6[%c0_18, %c0_19] : memref<1x32xbf16, #tpu.memory_space<vmem>>, vector<1x32xbf16>
      %23 = arith.extf %22 : vector<1x32xbf16> to vector<1x32xf32>
      %24 = vector.broadcast %23 : vector<1x32xf32> to vector<16x32xf32>
      %25 = arith.addf %21, %24 : vector<16x32xf32>
      %26 = arith.truncf %25 : vector<16x32xf32> to vector<16x32xbf16>
      %c0_20 = arith.constant 0 : index
      %c0_21 = arith.constant 0 : index
      %27 = vector.load %arg7[%c0_20, %c0_21] : memref<16x32xbf16, #tpu.memory_space<vmem>>, vector<16x32xbf16>
      tpu.vector_store %arg7[%c0_20, %c0_21], %26 {strides = array<i32>} : memref<16x32xbf16, #tpu.memory_space<vmem>>, vector<16x32xbf16>,
    } else {
    }
    return
  }
  func.func @transform_0(%arg0: i32, %arg1: i32) -> (i32, i32) {
    %c0_i32 = arith.constant 0 : i32
    %c0_i32_0 = arith.constant 0 : i32
    return %arg0, %c0_i32 : i32, i32
  }
  func.func @transform_1(%arg0: i32, %arg1: i32) -> (i32, i32) {
    %c0_i32 = arith.constant 0 : i32
    %c0_i32_0 = arith.constant 0 : i32
    return %c0_i32, %arg1 : i32, i32
  }
  func.func @transform_2(%arg0: i32, %arg1: i32) -> (i32, i32) {
    %c0_i32 = arith.constant 0 : i32
    %c0_i32_0 = arith.constant 0 : i32
    return %c0_i32, %arg1 : i32, i32
  }
  func.func @transform_3(%arg0: i32, %arg1: i32) -> (i32, i32) {
    %c0_i32 = arith.constant 0 : i32
    %c0_i32_0 = arith.constant 0 : i32
    return %arg1, %c0_i32 : i32, i32
  }
  func.func @transform_4(%arg0: i32, %arg1: i32) -> (i32, i32) {
    %c0_i32 = arith.constant 0 : i32
    %c0_i32_0 = arith.constant 0 : i32
    %c0_i32_1 = arith.constant 0 : i32
    return %c0_i32, %c0_i32_0 : i32, i32
  }
  func.func @transform_5(%arg0: i32, %arg1: i32) -> (i32, i32) {
    %c0_i32 = arith.constant 0 : i32
    %c0_i32_0 = arith.constant 0 : i32
    return %arg0, %c0_i32 : i32, i32
  }
}

module attributes {stable_mosaic.version = 11 : i64} {
  func.func @_linear_kernel(%arg0: i32, %arg1: i32, %arg2: i32, %arg3: memref<16x32xbf16, #tpu.memory_space<vmem>>, %arg4: memref<32x64xbf16, #tpu.memory_space<vmem>>, %arg5: memref<1x64xbf16, #tpu.memory_space<vmem>>, %arg6: memref<16x64xbf16, #tpu.memory_space<vmem>>, %arg7: memref<16x64xf32, #tpu.memory_space<vmem>>) attributes {dimension_semantics = [#tpu.dimension_semantics<parallel>, #tpu.dimension_semantics<parallel>, #tpu.dimension_semantics<arbitrary>], iteration_bounds = array<i64: 1, 1, 1>, scalar_prefetch = 0 : i64, scratch_operands = 1 : i64, tpu.core_type = #tpu.core_type<tc>, window_params = [{transform_indices = @transform_0, window_bounds = array<i64: 16, 32>}, {transform_indices = @transform_1, window_bounds = array<i64: 32, 64>}, {transform_indices = @transform_2, window_bounds = array<i64: 1, 64>}, {transform_indices = @transform_3, window_bounds = array<i64: 16, 64>}]} {
    %c0_i32 = arith.constant 0 : i32
    %0 = arith.cmpi eq, %arg2, %c0_i32 : i32
    %1 = arith.extui %0 : i1 to i32
    %c0_i32_0 = arith.constant 0 : i32
    %2 = arith.cmpi ne, %1, %c0_i32_0 : i32
    scf.if %2 {
      %cst_10 = arith.constant 0.000000e+00 : f32
      %12 = vector.broadcast %cst_10 : f32 to vector<16x64xf32>
      %c0_11 = arith.constant 0 : index
      %c0_12 = arith.constant 0 : index
      %13 = vector.load %arg7[%c0_11, %c0_12] : memref<16x64xf32, #tpu.memory_space<vmem>>, vector<16x64xf32>
      tpu.vector_store %arg7[%c0_11, %c0_12], %12 {strides = array<i32>} : memref<16x64xf32, #tpu.memory_space<vmem>>, vector<16x64xf32>,
    } else {
    }
    %c0 = arith.constant 0 : index
    %c0_1 = arith.constant 0 : index
    %3 = vector.load %arg7[%c0, %c0_1] : memref<16x64xf32, #tpu.memory_space<vmem>>, vector<16x64xf32>
    %c0_2 = arith.constant 0 : index
    %c0_3 = arith.constant 0 : index
    %4 = vector.load %arg3[%c0_2, %c0_3] : memref<16x32xbf16, #tpu.memory_space<vmem>>, vector<16x32xbf16>
    %c0_4 = arith.constant 0 : index
    %c0_5 = arith.constant 0 : index
    %5 = vector.load %arg4[%c0_4, %c0_5] : memref<32x64xbf16, #tpu.memory_space<vmem>>, vector<32x64xbf16>
    %cst = arith.constant dense<0.000000e+00> : vector<16x64xf32>
    %6 = tpu.matmul %4, %5, %cst {dimension_numbers = #tpu.dot_dimension_numbers<[1], [0], [0], [1], [0, 0, 1, 1], [], []>} : vector<16x32xbf16>, vector<32x64xbf16>, vector<16x64xf32> -> vector<16x64xf32>
    %7 = arith.addf %3, %6 : vector<16x64xf32>
    %c0_6 = arith.constant 0 : index
    %c0_7 = arith.constant 0 : index
    %8 = vector.load %arg7[%c0_6, %c0_7] : memref<16x64xf32, #tpu.memory_space<vmem>>, vector<16x64xf32>
    tpu.vector_store %arg7[%c0_6, %c0_7], %7 {strides = array<i32>} : memref<16x64xf32, #tpu.memory_space<vmem>>, vector<16x64xf32>,
    %c0_i32_8 = arith.constant 0 : i32
    %9 = arith.cmpi eq, %arg2, %c0_i32_8 : i32
    %10 = arith.extui %9 : i1 to i32
    %c0_i32_9 = arith.constant 0 : i32
    %11 = arith.cmpi ne, %10, %c0_i32_9 : i32
    scf.if %11 {
      %c0_10 = arith.constant 0 : index
      %c0_11 = arith.constant 0 : index
      %12 = vector.load %arg7[%c0_10, %c0_11] : memref<16x64xf32, #tpu.memory_space<vmem>>, vector<16x64xf32>
      %c0_12 = arith.constant 0 : index
      %c0_13 = arith.constant 0 : index
      %13 = vector.load %arg5[%c0_12, %c0_13] : memref<1x64xbf16, #tpu.memory_space<vmem>>, vector<1x64xbf16>
      %14 = arith.extf %13 : vector<1x64xbf16> to vector<1x64xf32>
      %15 = vector.broadcast %14 : vector<1x64xf32> to vector<16x64xf32>
      %16 = arith.addf %12, %15 : vector<16x64xf32>
      %17 = arith.truncf %16 : vector<16x64xf32> to vector<16x64xbf16>
      %c0_14 = arith.constant 0 : index
      %c0_15 = arith.constant 0 : index
      %18 = vector.load %arg6[%c0_14, %c0_15] : memref<16x64xbf16, #tpu.memory_space<vmem>>, vector<16x64xbf16>
      tpu.vector_store %arg6[%c0_14, %c0_15], %17 {strides = array<i32>} : memref<16x64xbf16, #tpu.memory_space<vmem>>, vector<16x64xbf16>,
    } else {
    }
    return
  }
  func.func @transform_0(%arg0: i32, %arg1: i32, %arg2: i32) -> (i32, i32) {
    %c0_i32 = arith.constant 0 : i32
    return %arg0, %arg2 : i32, i32
  }
  func.func @transform_1(%arg0: i32, %arg1: i32, %arg2: i32) -> (i32, i32) {
    %c0_i32 = arith.constant 0 : i32
    return %arg2, %arg1 : i32, i32
  }
  func.func @transform_2(%arg0: i32, %arg1: i32, %arg2: i32) -> (i32, i32) {
    %c0_i32 = arith.constant 0 : i32
    %c0_i32_0 = arith.constant 0 : i32
    return %c0_i32, %arg1 : i32, i32
  }
  func.func @transform_3(%arg0: i32, %arg1: i32, %arg2: i32) -> (i32, i32) {
    %c0_i32 = arith.constant 0 : i32
    return %arg0, %arg1 : i32, i32
  }
}

module attributes {stable_mosaic.version = 11 : i64} {
  func.func @_linear_kernel(%arg0: i32, %arg1: i32, %arg2: i32, %arg3: memref<16x32xbf16, #tpu.memory_space<vmem>>, %arg4: memref<32x13xbf16, #tpu.memory_space<vmem>>, %arg5: memref<1x13xbf16, #tpu.memory_space<vmem>>, %arg6: memref<16x13xf32, #tpu.memory_space<vmem>>, %arg7: memref<16x13xf32, #tpu.memory_space<vmem>>) attributes {dimension_semantics = [#tpu.dimension_semantics<parallel>, #tpu.dimension_semantics<parallel>, #tpu.dimension_semantics<arbitrary>], iteration_bounds = array<i64: 1, 1, 1>, scalar_prefetch = 0 : i64, scratch_operands = 1 : i64, tpu.core_type = #tpu.core_type<tc>, window_params = [{transform_indices = @transform_0, window_bounds = array<i64: 16, 32>}, {transform_indices = @transform_1, window_bounds = array<i64: 32, 13>}, {transform_indices = @transform_2, window_bounds = array<i64: 1, 13>}, {transform_indices = @transform_3, window_bounds = array<i64: 16, 13>}]} {
    %c0_i32 = arith.constant 0 : i32
    %0 = arith.cmpi eq, %arg2, %c0_i32 : i32
    %1 = arith.extui %0 : i1 to i32
    %c0_i32_0 = arith.constant 0 : i32
    %2 = arith.cmpi ne, %1, %c0_i32_0 : i32
    scf.if %2 {
      %cst_10 = arith.constant 0.000000e+00 : f32
      %12 = vector.broadcast %cst_10 : f32 to vector<16x13xf32>
      %c0_11 = arith.constant 0 : index
      %c0_12 = arith.constant 0 : index
      %13 = vector.load %arg7[%c0_11, %c0_12] : memref<16x13xf32, #tpu.memory_space<vmem>>, vector<16x13xf32>
      tpu.vector_store %arg7[%c0_11, %c0_12], %12 {strides = array<i32>} : memref<16x13xf32, #tpu.memory_space<vmem>>, vector<16x13xf32>,
    } else {
    }
    %c0 = arith.constant 0 : index
    %c0_1 = arith.constant 0 : index
    %3 = vector.load %arg7[%c0, %c0_1] : memref<16x13xf32, #tpu.memory_space<vmem>>, vector<16x13xf32>
    %c0_2 = arith.constant 0 : index
    %c0_3 = arith.constant 0 : index
    %4 = vector.load %arg3[%c0_2, %c0_3] : memref<16x32xbf16, #tpu.memory_space<vmem>>, vector<16x32xbf16>
    %c0_4 = arith.constant 0 : index
    %c0_5 = arith.constant 0 : index
    %5 = vector.load %arg4[%c0_4, %c0_5] : memref<32x13xbf16, #tpu.memory_space<vmem>>, vector<32x13xbf16>
    %cst = arith.constant dense<0.000000e+00> : vector<16x13xf32>
    %6 = tpu.matmul %4, %5, %cst {dimension_numbers = #tpu.dot_dimension_numbers<[1], [0], [0], [1], [0, 0, 1, 1], [], []>} : vector<16x32xbf16>, vector<32x13xbf16>, vector<16x13xf32> -> vector<16x13xf32>
    %7 = arith.addf %3, %6 : vector<16x13xf32>
    %c0_6 = arith.constant 0 : index
    %c0_7 = arith.constant 0 : index
    %8 = vector.load %arg7[%c0_6, %c0_7] : memref<16x13xf32, #tpu.memory_space<vmem>>, vector<16x13xf32>
    tpu.vector_store %arg7[%c0_6, %c0_7], %7 {strides = array<i32>} : memref<16x13xf32, #tpu.memory_space<vmem>>, vector<16x13xf32>,
    %c0_i32_8 = arith.constant 0 : i32
    %9 = arith.cmpi eq, %arg2, %c0_i32_8 : i32
    %10 = arith.extui %9 : i1 to i32
    %c0_i32_9 = arith.constant 0 : i32
    %11 = arith.cmpi ne, %10, %c0_i32_9 : i32
    scf.if %11 {
      %c0_10 = arith.constant 0 : index
      %c0_11 = arith.constant 0 : index
      %12 = vector.load %arg7[%c0_10, %c0_11] : memref<16x13xf32, #tpu.memory_space<vmem>>, vector<16x13xf32>
      %c0_12 = arith.constant 0 : index
      %c0_13 = arith.constant 0 : index
      %13 = vector.load %arg5[%c0_12, %c0_13] : memref<1x13xbf16, #tpu.memory_space<vmem>>, vector<1x13xbf16>
      %14 = arith.extf %13 : vector<1x13xbf16> to vector<1x13xf32>
      %15 = vector.broadcast %14 : vector<1x13xf32> to vector<16x13xf32>
      %16 = arith.addf %12, %15 : vector<16x13xf32>
      %c0_14 = arith.constant 0 : index
      %c0_15 = arith.constant 0 : index
      %17 = vector.load %arg6[%c0_14, %c0_15] : memref<16x13xf32, #tpu.memory_space<vmem>>, vector<16x13xf32>
      tpu.vector_store %arg6[%c0_14, %c0_15], %16 {strides = array<i32>} : memref<16x13xf32, #tpu.memory_space<vmem>>, vector<16x13xf32>,
    } else {
    }
    return
  }
  func.func @transform_0(%arg0: i32, %arg1: i32, %arg2: i32) -> (i32, i32) {
    %c0_i32 = arith.constant 0 : i32
    return %arg0, %arg2 : i32, i32
  }
  func.func @transform_1(%arg0: i32, %arg1: i32, %arg2: i32) -> (i32, i32) {
    %c0_i32 = arith.constant 0 : i32
    return %arg2, %arg1 : i32, i32
  }
  func.func @transform_2(%arg0: i32, %arg1: i32, %arg2: i32) -> (i32, i32) {
    %c0_i32 = arith.constant 0 : i32
    %c0_i32_0 = arith.constant 0 : i32
    return %c0_i32, %arg1 : i32, i32
  }
  func.func @transform_3(%arg0: i32, %arg1: i32, %arg2: i32) -> (i32, i32) {
    %c0_i32 = arith.constant 0 : i32
    return %arg0, %arg1 : i32, i32
  }
}

</mosaic_0001>

<llo_original>
// kernel: transformer_forward.50
$region0: #{transformer_forward.50}
  #allocation0 [shape = 'u32[]', space=smem, size = 0x4, offset = 0x4, fixed_abs, tag = 'smem constant byte address 0x4 - core index']
  #allocation1 [shape = 'u32[144,128]{1,0:T(1,128)}', space=vmem, size = 0x12000, scoped, tag = 'internal scratch']
  %s0 = inlined_call_operand.vmem [shape: bf16[16,32], index: 0, kind: input, shape index: {}]
  %s1 = inlined_call_operand.vmem [shape: bf16[16,32], index: 1, kind: input, shape index: {}]
  %s2 = inlined_call_operand.vmem [shape: bf16[1,32], index: 2, kind: input, shape index: {}]
  %s3 = inlined_call_operand.vmem [shape: bf16[1,32], index: 3, kind: input, shape index: {}]
  %s4 = inlined_call_operand.vmem [shape: bf16[16,32], index: 4, kind: output, shape index: {}]
  %s5 = sld [smem:[#allocation0]]
  $region26: #{transformer_forward.50} parent=0
    _
  %s7 = ssub.s32 1, %s5
  %s8 = scalar_select 0, %s7, %s5
  // Predicated region
  $region2: #{transformer_forward.50} parent=0 // pred_check
    _
  $region3: #{transformer_forward.50} parent=0 // pred_check_branch
    %10 = sbr.rel (0) target = $region5
  $region4: #{transformer_forward.50} parent=0 // pred_region
    _
  $region5: #{transformer_forward.50} parent=0 // pred_fallthru
    _
  // Predicated region
  $region6: #{transformer_forward.50} parent=0 // pred_check
    _
  $region7: #{transformer_forward.50} parent=0 // pred_check_branch
    %12 = sbr.rel (0) target = $region9
  $region8: #{transformer_forward.50} parent=0 // pred_region
    _
  $region9: #{transformer_forward.50} parent=0 // pred_fallthru
    _
  // Predicated region
  $region10: #{transformer_forward.50} parent=0 // pred_check
    _
  $region11: #{transformer_forward.50} parent=0 // pred_check_branch
    %14 = sbr.rel (0) target = $region13
  $region12: #{transformer_forward.50} parent=0 // pred_region
    _
  $region13: #{transformer_forward.50} parent=0 // pred_fallthru
    _
  // Predicated region
  $region14: #{transformer_forward.50} parent=0 // pred_check
    _
  $region15: #{transformer_forward.50} parent=0 // pred_check_branch
    %16 = sbr.rel (0) target = $region17
  $region16: #{transformer_forward.50} parent=0 // pred_region
    _
  $region17: #{transformer_forward.50} parent=0 // pred_fallthru
    _
  %v17 = vld [vmem:[%s0] sm:$0xf]
  %v18 = vld [vmem:[%s0 + $0x4] sm:$0xf]
  %v19 = vunpack.c.l.bf16 %v17
  %v20 = vunpack.c.l.bf16 %v18
  %v21 = vld [vmem:[%s1] sm:$0xf]
  %v22 = vld [vmem:[%s1 + $0x4] sm:$0xf]
  %v23 = vunpack.c.l.bf16 %v21
  %v24 = vunpack.c.l.bf16 %v22
  %v25 = vadd.f32 %v19, %v23
  %v26 = vadd.f32 %v20, %v24
  %vm27 = vcmask 261120
  %v28 = vsel %vm27, %v25, 0.0
  %29 = vadd.xlane.f32.xlu0 %v28
  %v30 = vpop.xlane.xlu0 %29
  %v31 = vsel %vm27, %v26, 0.0
  %32 = vadd.xlane.f32.xlu0 %v31
  %v33 = vpop.xlane.xlu0 %32
  %v34 = vrcp.pop 32.0
  %v35 = vmul.f32 %v30, %v34
  %v36 = vmul.f32 %v33, %v34
  %v37 = vsub.f32 %v25, %v35
  %v38 = vsub.f32 %v26, %v36
  %v39 = vmul.f32 %v37, %v37
  %v40 = vmul.f32 %v38, %v38
  %v41 = vsel %vm27, %v39, 0.0
  %42 = vadd.xlane.f32.xlu0 %v41
  %v43 = vpop.xlane.xlu0 %42
  %v44 = vsel %vm27, %v40, 0.0
  %45 = vadd.xlane.f32.xlu0 %v44
  %v46 = vpop.xlane.xlu0 %45
  %v47 = vmul.f32 %v43, %v34
  %v48 = vmul.f32 %v46, %v34
  %v49 = vadd.f32 %v47, 1e-05
  %v50 = vadd.f32 %v48, 1e-05
  %v51 = vrsqrt.pop %v49
  %v52 = vrsqrt.pop %v50
  %v53 = vmul.f32 %v37, %v51
  %v54 = vmul.f32 %v38, %v52
  %v55 = vld [vmem:[%s2] sm:$0x1]
  %v56 = vunpack.c.l.bf16 %v55
  %v57 = vlaneseq
  %v58 = vshrl.u32 %v57, 7
  %v59 = vsub.s32 0, %v58
  %v60 = vrot.slane %v56, %v59
  %v61 = vmul.f32 %v53, %v60
  %v62 = vmul.f32 %v54, %v60
  %v63 = vld [vmem:[%s3] sm:$0x1]
  %v64 = vunpack.c.l.bf16 %v63
  %v65 = vlaneseq
  %v66 = vshrl.u32 %v65, 7
  %v67 = vsub.s32 0, %v66
  %v68 = vrot.slane %v64, %v67
  %v69 = vadd.f32 %v61, %v68
  %v70 = vadd.f32 %v62, %v68
  %v71 = vpack.c.bf16 %v70, %v69
  %v73 = vunpack.c.l.b16 %v71
  %v74 = vunpack.c.h.b16 %v71
  %v75 = vpack.c.b16 %v73, %v73
  %v76 = vpack.c.b16 %v74, %v74
  %vm79 = vcmask 257024
  %80 = vst.msk [vmem:[%s4] sm:$0xf] %vm79, %v75
  %81 = vst.msk [vmem:[%s4 + $0x4] sm:$0xf] %vm79, %v76
  // Predicated region
  $region18: #{transformer_forward.50} parent=0 // pred_check
    _
  $region19: #{transformer_forward.50} parent=0 // pred_check_branch
    %83 = sbr.rel (0) target = $region21
  $region20: #{transformer_forward.50} parent=0 // pred_region
    _
  $region21: #{transformer_forward.50} parent=0 // pred_fallthru
    _
  // Predicated region
  $region22: #{transformer_forward.50} parent=0 // pred_check
    _
  $region23: #{transformer_forward.50} parent=0 // pred_check_branch
    %85 = sbr.rel (0) target = $region25
  $region24: #{transformer_forward.50} parent=0 // pred_region
    _
  $region25: #{transformer_forward.50} parent=0 // pred_fallthru
    _

// kernel: transformer_forward.47
$region0: #{transformer_forward.47}
  #allocation0 [shape = 'u32[]', space=smem, size = 0x4, offset = 0x4, fixed_abs, tag = 'smem constant byte address 0x4 - core index']
  #allocation1 [shape = 'u32[144,128]{1,0:T(1,128)}', space=vmem, size = 0x12000, scoped, tag = 'internal scratch']
  #allocation2 [shape = 'f32[16,96]{1,0:T(8,128)}', space=vmem, size = 0x2000, scoped, tag = 'scratch operand']
  %s0 = inlined_call_operand.vmem [shape: bf16[16,32], index: 0, kind: input, shape index: {}]
  %s1 = inlined_call_operand.vmem [shape: bf16[32,96], index: 1, kind: input, shape index: {}]
  %s2 = inlined_call_operand.vmem [shape: bf16[1,96], index: 2, kind: input, shape index: {}]
  %s3 = inlined_call_operand.vmem [shape: bf16[16,96], index: 3, kind: output, shape index: {}]
  %s4 = sld [smem:[#allocation0]]
  $region30: #{transformer_forward.47} parent=0
    _
  %s6 = ssub.s32 1, %s4
  %s7 = scalar_select 0, %s6, %s4
  // Predicated region
  $region2: #{transformer_forward.47} parent=0 // pred_check
    _
  $region3: #{transformer_forward.47} parent=0 // pred_check_branch
    %9 = sbr.rel (0) target = $region5
  $region4: #{transformer_forward.47} parent=0 // pred_region
    _
  $region5: #{transformer_forward.47} parent=0 // pred_fallthru
    _
  // Predicated region
  $region6: #{transformer_forward.47} parent=0 // pred_check
    _
  $region7: #{transformer_forward.47} parent=0 // pred_check_branch
    %11 = sbr.rel (0) target = $region9
  $region8: #{transformer_forward.47} parent=0 // pred_region
    _
  $region9: #{transformer_forward.47} parent=0 // pred_fallthru
    _
  // Predicated region
  $region10: #{transformer_forward.47} parent=0 // pred_check
    _
  $region11: #{transformer_forward.47} parent=0 // pred_check_branch
    %13 = sbr.rel (0) target = $region13
  $region12: #{transformer_forward.47} parent=0 // pred_region
    _
  $region13: #{transformer_forward.47} parent=0 // pred_fallthru
    _
  %p15 = scmp.eq.s32.totalorder 0, 0
  // Predicated region
  $region14: #{transformer_forward.47} parent=0 // pred_check
    %p16 = pneg %p15
  $region15: #{transformer_forward.47} parent=0 // pred_check_branch
    %18 = sbr.rel (%p16) target = $region17
  $region16: #{transformer_forward.47} parent=0 // pred_region
    %vm19 = vcmask 785408
    %20 = vst.msk [vmem:[#allocation2] sm:$0xff] %vm19, 0.0
    %21 = vst.msk [vmem:[#allocation2 + $0x8] sm:$0xff] %vm19, 0.0
  $region17: #{transformer_forward.47} parent=0 // pred_fallthru
    _
  %v22 = vld [vmem:[#allocation2] sm:$0xff]
  %v23 = vld [vmem:[#allocation2 + $0x8] sm:$0xff]
  %v24 = vld [vmem:[%s0] sm:$0xf]
  %v25 = vld [vmem:[%s0 + $0x4] sm:$0xf]
  %v26 = vld [vmem:[%s1] sm:$0xf]
  %v27 = vld [vmem:[%s1 + $0x4] sm:$0xf]
  %v28 = vld [vmem:[%s1 + $0x8] sm:$0xf]
  %v29 = vld [vmem:[%s1 + $0xc] sm:$0xf]
  %v32 = vunpack.c.l.b16 %v24
  %v33 = vunpack.c.l.b16 %v25
  %v34 = vpack.c.b16 %v33, %v32
  %v39 = vunpack.c.l.b16 %v26
  %v40 = vunpack.c.l.b16 %v27
  %v41 = vunpack.c.l.b16 %v28
  %v42 = vunpack.c.l.b16 %v29
  %v43 = vpack.c.b16 %v40, %v39
  %v44 = vpack.c.b16 %v42, %v41
  %vm47 = vcmask 261120
  %v49 = vsel %vm47, %v34, 0
  %51 = vmatprep.subr.bf16.mxu0 0
  %52 = vmatpush1.bf16.msra.mxu0 %v43
  %53 = vmatprep.subr.bf16.mxu0 0
  %54 = vmatpush1.bf16.msra.mxu0 %v44
  %55 = vmatprep.subr.bf16.mxu0 0
  %56 = vmatpush1.bf16.msra.mxu0 0
  %57 = vmatprep.subr.bf16.mxu0 0
  %58 = vmatpush1.bf16.msra.mxu0 0
  %59 = vmatprep.subr.bf16.mxu0 0
  %60 = vmatpush1.bf16.msra.mxu0 0
  %61 = vmatprep.subr.bf16.mxu0 0
  %62 = vmatpush1.bf16.msra.mxu0 0
  %63 = vmatprep.subr.bf16.mxu0 0
  %64 = vmatpush1.bf16.msra.mxu0 0
  %65 = vmatprep.subr.bf16.mxu0 0
  %66 = vmatpush1.bf16.msra.mxu0 0
  %67 = vmatprep.subr.bf16.mxu0 0
  %68 = vmatpush1.bf16.msra.mxu0 0
  %69 = vmatprep.subr.bf16.mxu0 0
  %70 = vmatpush1.bf16.msra.mxu0 0
  %71 = vmatprep.subr.bf16.mxu0 0
  %72 = vmatpush1.bf16.msra.mxu0 0
  %73 = vmatprep.subr.bf16.mxu0 0
  %74 = vmatpush1.bf16.msra.mxu0 0
  %75 = vmatprep.subr.bf16.mxu0 0
  %76 = vmatpush1.bf16.msra.mxu0 0
  %77 = vmatprep.subr.bf16.mxu0 0
  %78 = vmatpush1.bf16.msra.mxu0 0
  %79 = vmatprep.subr.bf16.mxu0 0
  %80 = vmatpush1.bf16.msra.mxu0 0
  %81 = vmatprep.subr.bf16.mxu0 0
  %82 = vmatpush1.bf16.msra.mxu0 0
  %83 = vmatprep.mubr.bf16.mxu0 0
  %84 = vmatmul.mubr.bf16.gmra.mrb[0].mxu0 %v49
  %v85 = vpop.f32.mrb[0].mxu0
  %v86 = vadd.f32 0.0, %v85
  %v87 = vpop.f32.mrb[0].mxu0
  %v88 = vpop.f32.mrb[0].mxu0
  %v89 = vadd.f32 0.0, %v88
  %v90 = vpop.f32.mrb[0].mxu0
  %91 = vdwg.mxu0
  %v92 = vadd.f32 %v22, %v86
  %v93 = vadd.f32 %v23, %v89
  %vm94 = vcmask 785408
  %95 = vst.msk [vmem:[#allocation2] sm:$0xff] %vm94, %v92
  %96 = vst.msk [vmem:[#allocation2 + $0x8] sm:$0xff] %vm94, %v93
  // Predicated region
  $region18: #{transformer_forward.47} parent=0 // pred_check
    %p97 = pneg %p15
  $region19: #{transformer_forward.47} parent=0 // pred_check_branch
    %99 = sbr.rel (%p97) target = $region21
  $region20: #{transformer_forward.47} parent=0 // pred_region
    %v100 = vld [vmem:[#allocation2] sm:$0xff]
    %v101 = vld [vmem:[#allocation2 + $0x8] sm:$0xff]
    %v102 = vld [vmem:[%s2] sm:$0x1]
    %v103 = vunpack.c.l.bf16 %v102
    %v104 = vlaneseq
    %v105 = vshrl.u32 %v104, 7
    %v106 = vsub.s32 0, %v105
    %v107 = vrot.slane %v103, %v106
    %v108 = vadd.f32 %v100, %v107
    %v109 = vadd.f32 %v101, %v107
    %v110 = vpack.c.bf16 %v109, %v108
    %v112 = vunpack.c.l.b16 %v110
    %v113 = vunpack.c.h.b16 %v110
    %v114 = vpack.c.b16 %v112, %v112
    %v115 = vpack.c.b16 %v113, %v113
    %vm118 = vcmask 781312
    %119 = vst.msk [vmem:[%s3] sm:$0xf] %vm118, %v114
    %120 = vst.msk [vmem:[%s3 + $0x4] sm:$0xf] %vm118, %v115
  $region21: #{transformer_forward.47} parent=0 // pred_fallthru
    _
  // Predicated region
  $region22: #{transformer_forward.47} parent=0 // pred_check
    _
  $region23: #{transformer_forward.47} parent=0 // pred_check_branch
    %122 = sbr.rel (0) target = $region25
  $region24: #{transformer_forward.47} parent=0 // pred_region
    _
  $region25: #{transformer_forward.47} parent=0 // pred_fallthru
    _
  // Predicated region
  $region26: #{transformer_forward.47} parent=0 // pred_check
    _
  $region27: #{transformer_forward.47} parent=0 // pred_check_branch
    %124 = sbr.rel (0) target = $region29
  $region28: #{transformer_forward.47} parent=0 // pred_region
    _
  $region29: #{transformer_forward.47} parent=0 // pred_fallthru
    _

// kernel: transformer_forward.48
$region0: #{transformer_forward.48}
  #allocation0 [shape = 'u32[]', space=smem, size = 0x4, offset = 0x4, fixed_abs, tag = 'smem constant byte address 0x4 - core index']
  #allocation1 [shape = 'u32[144,128]{1,0:T(1,128)}', space=vmem, size = 0x12000, scoped, tag = 'internal scratch']
  #allocation2 [shape = 'f32[8,1]{1,0:T(8,128)}', space=vmem, size = 0x1000, scoped, tag = 'scratch operand']
  #allocation3 [shape = 'f32[8,1]{1,0:T(8,128)}', space=vmem, size = 0x1000, scoped, tag = 'scratch operand']
  #allocation4 [shape = 'f32[8,8]{1,0:T(8,128)}', space=vmem, size = 0x1000, scoped, tag = 'scratch operand']
  %s0 = inlined_call_operand.vmem [shape: bf16[2,4,8,8], index: 0, kind: input, shape index: {}]
  %s1 = inlined_call_operand.vmem [shape: bf16[2,4,8,8], index: 1, kind: input, shape index: {}]
  %s2 = inlined_call_operand.vmem [shape: bf16[2,4,8,8], index: 2, kind: input, shape index: {}]
  %s3 = inlined_call_operand.vmem [shape: bf16[2,4,8,8], index: 3, kind: output, shape index: {}]
  %s4 = sld [smem:[#allocation0]]
  $region53: #{transformer_forward.48} parent=0
    _
  %s6 = ssub.s32 1, %s4
  %s7 = scalar_select 0, %s6, %s4
  loop: start=0, step=1, limit=10
  $region2: #{transformer_forward.48} parent=0 // loop_pre_header
    _
  $region3: #{transformer_forward.48} parent=0 // loop_header
    %s9 = sphi 0, %s13
    %p10 = scmp.ge.s32.totalorder %s9, 10
    %s16 = sphi 0, %s42
    %s17 = sphi 0, %s38
    %s18 = sphi 0, %s34
    %s19 = sphi 0, %s30
    %s20 = sphi 0, %s16
    %s21 = sphi 0, %s17
    %s22 = sphi 0, %s18
    %s23 = sphi 0, %s19
    %s24 = sphi 0, %s20
    %s25 = sphi 0, %s21
    %s26 = sphi 0, %s22
    %s27 = sphi 0, %s23
    %s49 = sphi 0, %s51
    %s52 = sphi 0, %s49
    %s53 = sphi 0, %s52
    %s69 = sphi 0, %s53
    %s79 = sphi 0, %s81
    %s82 = sphi 0, %s79
    %s83 = sphi 0, %s82
    %s99 = sphi 0, %s83
    %s109 = sphi 0, %s111
    %s112 = sphi 0, %s109
    %s113 = sphi 0, %s112
    %s129 = sphi 0, %s113
    %s139 = sphi 0, %s141
    %s142 = sphi 0, %s139
    %s143 = sphi 0, %s142
    %s159 = sphi 0, %s143
  $region4: #{transformer_forward.48} parent=0 // loop_header_branch
    %12 = sbr.rel (%p10) target = $region8
  $region5: #{transformer_forward.48} parent=0 // loop_body
    %s14 = ssub.s32 %s9, 1
    %s15 = ssub.s32 %s9, 2
    %s28 = sadd.s32 1, %s19
    %p29 = scmp.ge.s32.totalorder %s28, 1
    %s30 = scalar_select %p29, 0, %s28
    %s31 = sadd.s32 1, %s18
    %s32 = scalar_select %p29, %s31, %s18
    %p33 = scmp.ge.s32.totalorder %s32, 1
    %s34 = scalar_select %p33, 0, %s32
    %s35 = sadd.s32 1, %s17
    %s36 = scalar_select %p33, %s35, %s17
    %p37 = scmp.ge.s32.totalorder %s36, 4
    %s38 = scalar_select %p37, 0, %s36
    %s39 = sadd.s32 1, %s16
    %s40 = scalar_select %p37, %s39, %s16
    %p41 = scmp.ge.s32.totalorder %s40, 2
    %s42 = scalar_select %p41, 0, %s40
    %s43 = ssub.s32 %s16, %s42
    %s44 = ssub.s32 %s17, %s38
    %s45 = sor.u32 %s43, %s44
    %s46 = ssub.s32 %s18, %s34
    %s47 = sor.u32 %s45, %s46
    %p48 = scmp.eq.s32.totalorder %s47, 0
    %s50 = sadd.s32 %s49, 1
    %s51 = scalar_select %p48, %s49, %s50
    %p54 = pneg %p48
    %p55 = scmp.eq.s32.totalorder %s9, 7
    %p56 = por %p54, %p55
    %p57 = scmp.ne.s32.totalorder %s49, %s52
    %p58 = scmp.eq.s32.totalorder %s9, 0
    %p59 = por %p57, %p58
    %p60 = scmp.ne.s32.totalorder %s49, %s52
    %p61 = scmp.eq.s32.totalorder %s14, 7
    %p62 = por %p60, %p61
    %p63 = scmp.ne.s32.totalorder %s52, %s53
    %p64 = scmp.eq.s32.totalorder %s14, 0
    %p65 = por %p63, %p64
    %p66 = scmp.ne.s32.totalorder %s52, %s53
    %p67 = scmp.eq.s32.totalorder %s15, 7
    %p68 = por %p66, %p67
    %p70 = scmp.ne.s32.totalorder %s53, %s69
    %p71 = scmp.eq.s32.totalorder %s15, 0
    %p72 = por %p70, %p71
    %s73 = ssub.s32 %s16, %s42
    %s74 = ssub.s32 %s17, %s38
    %s75 = sor.u32 %s73, %s74
    %s76 = ssub.s32 %s19, %s30
    %s77 = sor.u32 %s75, %s76
    %p78 = scmp.eq.s32.totalorder %s77, 0
    %s80 = sadd.s32 %s79, 1
    %s81 = scalar_select %p78, %s79, %s80
    %p84 = pneg %p78
    %p85 = scmp.eq.s32.totalorder %s9, 7
    %p86 = por %p84, %p85
    %p87 = scmp.ne.s32.totalorder %s79, %s82
    %p88 = scmp.eq.s32.totalorder %s9, 0
    %p89 = por %p87, %p88
    %p90 = scmp.ne.s32.totalorder %s79, %s82
    %p91 = scmp.eq.s32.totalorder %s14, 7
    %p92 = por %p90, %p91
    %p93 = scmp.ne.s32.totalorder %s82, %s83
    %p94 = scmp.eq.s32.totalorder %s14, 0
    %p95 = por %p93, %p94
    %p96 = scmp.ne.s32.totalorder %s82, %s83
    %p97 = scmp.eq.s32.totalorder %s15, 7
    %p98 = por %p96, %p97
    %p100 = scmp.ne.s32.totalorder %s83, %s99
    %p101 = scmp.eq.s32.totalorder %s15, 0
    %p102 = por %p100, %p101
    %s103 = ssub.s32 %s16, %s42
    %s104 = ssub.s32 %s17, %s38
    %s105 = sor.u32 %s103, %s104
    %s106 = ssub.s32 %s19, %s30
    %s107 = sor.u32 %s105, %s106
    %p108 = scmp.eq.s32.totalorder %s107, 0
    %s110 = sadd.s32 %s109, 1
    %s111 = scalar_select %p108, %s109, %s110
    %p114 = pneg %p108
    %p115 = scmp.eq.s32.totalorder %s9, 7
    %p116 = por %p114, %p115
    %p117 = scmp.ne.s32.totalorder %s109, %s112
    %p118 = scmp.eq.s32.totalorder %s9, 0
    %p119 = por %p117, %p118
    %p120 = scmp.ne.s32.totalorder %s109, %s112
    %p121 = scmp.eq.s32.totalorder %s14, 7
    %p122 = por %p120, %p121
    %p123 = scmp.ne.s32.totalorder %s112, %s113
    %p124 = scmp.eq.s32.totalorder %s14, 0
    %p125 = por %p123, %p124
    %p126 = scmp.ne.s32.totalorder %s112, %s113
    %p127 = scmp.eq.s32.totalorder %s15, 7
    %p128 = por %p126, %p127
    %p130 = scmp.ne.s32.totalorder %s113, %s129
    %p131 = scmp.eq.s32.totalorder %s15, 0
    %p132 = por %p130, %p131
    %s133 = ssub.s32 %s16, %s42
    %s134 = ssub.s32 %s17, %s38
    %s135 = sor.u32 %s133, %s134
    %s136 = ssub.s32 %s18, %s34
    %s137 = sor.u32 %s135, %s136
    %p138 = scmp.eq.s32.totalorder %s137, 0
    %s140 = sadd.s32 %s139, 1
    %s141 = scalar_select %p138, %s139, %s140
    %p144 = pneg %p138
    %p145 = scmp.eq.s32.totalorder %s9, 7
    %p146 = por %p144, %p145
    %p147 = scmp.ne.s32.totalorder %s139, %s142
    %p148 = scmp.eq.s32.totalorder %s9, 0
    %p149 = por %p147, %p148
    %p150 = scmp.ne.s32.totalorder %s139, %s142
    %p151 = scmp.eq.s32.totalorder %s14, 7
    %p152 = por %p150, %p151
    %p153 = scmp.ne.s32.totalorder %s142, %s143
    %p154 = scmp.eq.s32.totalorder %s14, 0
    %p155 = por %p153, %p154
    %p156 = scmp.ne.s32.totalorder %s142, %s143
    %p157 = scmp.eq.s32.totalorder %s15, 7
    %p158 = por %p156, %p157
    %p160 = scmp.ne.s32.totalorder %s143, %s159
    %p161 = scmp.eq.s32.totalorder %s15, 0
    %p162 = por %p160, %p161
    %p163 = scmp.le.s32.totalorder 1, %s9
    %p164 = scmp.lt.s32.totalorder %s9, 9
    %p165 = pnand %p163, %p164
    %p166 = pneg %p165
    // Predicated region
    $region9: #{transformer_forward.48} parent=5 // pred_check
      _
    $region10: #{transformer_forward.48} parent=5 // pred_check_branch
      %168 = sbr.rel (%p165) target = $region12
    $region11: #{transformer_forward.48} parent=5 // pred_region
      %s169 = ssub.s32 %s9, 1
    $region12: #{transformer_forward.48} parent=5 // pred_fallthru
      _
    %p170 = scmp.lt.s32.totalorder %s9, 8
    // Predicated region
    $region13: #{transformer_forward.48} parent=5 // pred_check
      %p171 = pneg %p170
    $region14: #{transformer_forward.48} parent=5 // pred_check_branch
      %173 = sbr.rel (%p171) target = $region16
    $region15: #{transformer_forward.48} parent=5 // pred_region
      // Predicated region
      $region17: #{transformer_forward.48} parent=15 // pred_check
        %p174 = pneg %p59
      $region18: #{transformer_forward.48} parent=15 // pred_check_branch
        %176 = sbr.rel (%p174) target = $region20
      $region19: #{transformer_forward.48} parent=15 // pred_region
        %p177 = scmp.lt.s32.totalorder %s16, 1
        %s178 = scalar_select %p177, %s16, 1
        %p179 = scmp.lt.s32.totalorder %s17, 3
        %s180 = scalar_select %p179, %s17, 3
        %p181 = scmp.lt.s32.totalorder %s18, 0
        %s182 = scalar_select %p181, %s18, 0
        %s183 = sadd.s32 %s182, %s180
        %s184 = smul.addr %s178, 4
        %s185 = sadd.s32 %s183, %s184
        %s186 = smul.addr %s185, 4
        %s187 = scalar_lea.vmem %s0, %s186
      $region20: #{transformer_forward.48} parent=15 // pred_fallthru
        _
      // Predicated region
      $region21: #{transformer_forward.48} parent=15 // pred_check
        %p188 = pneg %p89
      $region22: #{transformer_forward.48} parent=15 // pred_check_branch
        %190 = sbr.rel (%p188) target = $region24
      $region23: #{transformer_forward.48} parent=15 // pred_region
        %p191 = scmp.lt.s32.totalorder %s16, 1
        %s192 = scalar_select %p191, %s16, 1
        %p193 = scmp.lt.s32.totalorder %s17, 3
        %s194 = scalar_select %p193, %s17, 3
        %p195 = scmp.lt.s32.totalorder %s19, 0
        %s196 = scalar_select %p195, %s19, 0
        %s197 = sadd.s32 %s196, %s194
        %s198 = smul.addr %s192, 4
        %s199 = sadd.s32 %s197, %s198
        %s200 = smul.addr %s199, 4
        %s201 = scalar_lea.vmem %s1, %s200
      $region24: #{transformer_forward.48} parent=15 // pred_fallthru
        _
      // Predicated region
      $region25: #{transformer_forward.48} parent=15 // pred_check
        %p202 = pneg %p119
      $region26: #{transformer_forward.48} parent=15 // pred_check_branch
        %204 = sbr.rel (%p202) target = $region28
      $region27: #{transformer_forward.48} parent=15 // pred_region
        %p205 = scmp.lt.s32.totalorder %s16, 1
        %s206 = scalar_select %p205, %s16, 1
        %p207 = scmp.lt.s32.totalorder %s17, 3
        %s208 = scalar_select %p207, %s17, 3
        %p209 = scmp.lt.s32.totalorder %s19, 0
        %s210 = scalar_select %p209, %s19, 0
        %s211 = sadd.s32 %s210, %s208
        %s212 = smul.addr %s206, 4
        %s213 = sadd.s32 %s211, %s212
        %s214 = smul.addr %s213, 4
        %s215 = scalar_lea.vmem %s2, %s214
      $region28: #{transformer_forward.48} parent=15 // pred_fallthru
        _
    $region16: #{transformer_forward.48} parent=5 // pred_fallthru
      _
    %p216 = scmp.le.s32.totalorder 1, %s9
    %p217 = scmp.lt.s32.totalorder %s9, 9
    %p218 = pnand %p216, %p217
    %p219 = pneg %p218
    // Predicated region
    $region29: #{transformer_forward.48} parent=5 // pred_check
      _
    $region30: #{transformer_forward.48} parent=5 // pred_check_branch
      %221 = sbr.rel (%p218) target = $region32
    $region31: #{transformer_forward.48} parent=5 // pred_region
      %s222 = ssub.s32 %s9, 1
      %p223 = scmp.lt.s32.totalorder %s20, 1
      %s224 = scalar_select %p223, %s20, 1
      %p225 = scmp.lt.s32.totalorder %s21, 3
      %s226 = scalar_select %p225, %s21, 3
      %p227 = scmp.lt.s32.totalorder %s22, 0
      %s228 = scalar_select %p227, %s22, 0
      %s229 = sadd.s32 %s228, %s226
      %s230 = smul.addr %s224, 4
      %s231 = sadd.s32 %s229, %s230
      %s232 = smul.addr %s231, 4
      %s233 = scalar_lea.vmem %s0, %s232
      %p234 = pneg %p65
      %p235 = pneg %p62
      %p236 = scmp.lt.s32.totalorder %s20, 1
      %s237 = scalar_select %p236, %s20, 1
      %p238 = scmp.lt.s32.totalorder %s21, 3
      %s239 = scalar_select %p238, %s21, 3
      %p240 = scmp.lt.s32.totalorder %s23, 0
      %s241 = scalar_select %p240, %s23, 0
      %s242 = sadd.s32 %s241, %s239
      %s243 = smul.addr %s237, 4
      %s244 = sadd.s32 %s242, %s243
      %s245 = smul.addr %s244, 4
      %s246 = scalar_lea.vmem %s1, %s245
      %p247 = pneg %p95
      %p248 = pneg %p92
      %p249 = scmp.lt.s32.totalorder %s20, 1
      %s250 = scalar_select %p249, %s20, 1
      %p251 = scmp.lt.s32.totalorder %s21, 3
      %s252 = scalar_select %p251, %s21, 3
      %p253 = scmp.lt.s32.totalorder %s23, 0
      %s254 = scalar_select %p253, %s23, 0
      %s255 = sadd.s32 %s254, %s252
      %s256 = smul.addr %s250, 4
      %s257 = sadd.s32 %s255, %s256
      %s258 = smul.addr %s257, 4
      %s259 = scalar_lea.vmem %s2, %s258
      %p260 = pneg %p125
      %p261 = pneg %p122
      %p262 = pneg %p155
      %p263 = pneg %p152
      %p264 = scmp.lt.s32.totalorder %s20, 1
      %s265 = scalar_select %p264, %s20, 1
      %p266 = scmp.lt.s32.totalorder %s21, 3
      %s267 = scalar_select %p266, %s21, 3
      %p268 = scmp.lt.s32.totalorder %s22, 0
      %s269 = scalar_select %p268, %s22, 0
      %s270 = sadd.s32 %s269, %s267
      %s271 = smul.addr %s265, 4
      %s272 = sadd.s32 %s270, %s271
      %s273 = smul.addr %s272, 4
      %s274 = scalar_lea.vmem %s3, %s273
      %p275 = scmp.lt.s32.totalorder %s20, 1
      %s276 = scalar_select %p275, %s20, 1
      %p277 = scmp.lt.s32.totalorder %s21, 3
      %s278 = scalar_select %p277, %s21, 3
      %p279 = scmp.lt.s32.totalorder %s22, 0
      %s280 = scalar_select %p279, %s22, 0
      %s281 = sadd.s32 %s280, %s278
      %s282 = smul.addr %s276, 4
      %s283 = sadd.s32 %s281, %s282
      %s284 = smul.addr %s283, 4
      %s285 = scalar_lea.vmem %s0, %s284
      %p286 = scmp.lt.s32.totalorder %s20, 1
      %s287 = scalar_select %p286, %s20, 1
      %p288 = scmp.lt.s32.totalorder %s21, 3
      %s289 = scalar_select %p288, %s21, 3
      %p290 = scmp.lt.s32.totalorder %s23, 0
      %s291 = scalar_select %p290, %s23, 0
      %s292 = sadd.s32 %s291, %s289
      %s293 = smul.addr %s287, 4
      %s294 = sadd.s32 %s292, %s293
      %s295 = smul.addr %s294, 4
      %s296 = scalar_lea.vmem %s1, %s295
      %p297 = scmp.lt.s32.totalorder %s20, 1
      %s298 = scalar_select %p297, %s20, 1
      %p299 = scmp.lt.s32.totalorder %s21, 3
      %s300 = scalar_select %p299, %s21, 3
      %p301 = scmp.lt.s32.totalorder %s23, 0
      %s302 = scalar_select %p301, %s23, 0
      %s303 = sadd.s32 %s302, %s300
      %s304 = smul.addr %s298, 4
      %s305 = sadd.s32 %s303, %s304
      %s306 = smul.addr %s305, 4
      %s307 = scalar_lea.vmem %s2, %s306
      %p308 = scmp.lt.s32.totalorder %s20, 1
      %s309 = scalar_select %p308, %s20, 1
      %p310 = scmp.lt.s32.totalorder %s21, 3
      %s311 = scalar_select %p310, %s21, 3
      %p312 = scmp.lt.s32.totalorder %s22, 0
      %s313 = scalar_select %p312, %s22, 0
      %s314 = sadd.s32 %s313, %s311
      %s315 = smul.addr %s309, 4
      %s316 = sadd.s32 %s314, %s315
      %s317 = smul.addr %s316, 4
      %s318 = scalar_lea.vmem %s3, %s317
      %p320 = scmp.eq.s32.totalorder %s23, 0
      // Predicated region
      $region33: #{transformer_forward.48} parent=31 // pred_check
        %p321 = pneg %p320
      $region34: #{transformer_forward.48} parent=31 // pred_check_branch
        %323 = sbr.rel (%p321) target = $region36
      $region35: #{transformer_forward.48} parent=31 // pred_region
        %vm324 = vcmask 7168
        %325 = vst.msk [vmem:[#allocation2] sm:$0xff] %vm324, -1e+30
        %326 = vst.msk [vmem:[#allocation3] sm:$0xff] %vm324, 0.0
        %vm327 = vcmask 64512
        %328 = vst.msk [vmem:[#allocation4] sm:$0xff] %vm327, 0.0
      $region36: #{transformer_forward.48} parent=31 // pred_fallthru
        _
      %v329 = vld [vmem:[%s285] sm:$0xf]
      %v330 = vunpack.c.l.bf16 %v329
      %v331 = vmul.f32 %v330, 0.35355338
      %v332 = vpack.c.bf16 %v331, %v331
      %v333 = vld [vmem:[%s296] sm:$0xf]
      %v334 = vld [vmem:[%s307] sm:$0xf]
      %vm335 = vcmask 64512
      %v337 = vsel %vm335, %v332, 0
      %v340 = vsel %vm335, %v333, 0
      %342 = vmatprep.subr.bf16.mxu0 0
      %343 = vmatpush1.bf16.xpose.msra.mxu0 %v340
      %344 = vmatprep.subr.bf16.mxu0 0
      %345 = vmatpush1.bf16.xpose.msra.mxu0 0
      %346 = vmatprep.subr.bf16.mxu0 0
      %347 = vmatpush1.bf16.xpose.msra.mxu0 0
      %348 = vmatprep.subr.bf16.mxu0 0
      %349 = vmatpush1.bf16.xpose.msra.mxu0 0
      %350 = vmatprep.subr.bf16.mxu0 0
      %351 = vmatpush1.bf16.xpose.msra.mxu0 0
      %352 = vmatprep.subr.bf16.mxu0 0
      %353 = vmatpush1.bf16.xpose.msra.mxu0 0
      %354 = vmatprep.subr.bf16.mxu0 0
      %355 = vmatpush1.bf16.xpose.msra.mxu0 0
      %356 = vmatprep.subr.bf16.mxu0 0
      %357 = vmatpush1.bf16.xpose.msra.mxu0 0
      %358 = vmatprep.subr.bf16.mxu0 0
      %359 = vmatpush1.bf16.xpose.msra.mxu0 0
      %360 = vmatprep.subr.bf16.mxu0 0
      %361 = vmatpush1.bf16.xpose.msra.mxu0 0
      %362 = vmatprep.subr.bf16.mxu0 0
      %363 = vmatpush1.bf16.xpose.msra.mxu0 0
      %364 = vmatprep.subr.bf16.mxu0 0
      %365 = vmatpush1.bf16.xpose.msra.mxu0 0
      %366 = vmatprep.subr.bf16.mxu0 0
      %367 = vmatpush1.bf16.xpose.msra.mxu0 0
      %368 = vmatprep.subr.bf16.mxu0 0
      %369 = vmatpush1.bf16.xpose.msra.mxu0 0
      %370 = vmatprep.subr.bf16.mxu0 0
      %371 = vmatpush1.bf16.xpose.msra.mxu0 0
      %372 = vmatprep.subr.bf16.mxu0 0
      %373 = vmatpush1.bf16.xpose.msra.mxu0 0
      %374 = vmatprep.mubr.bf16.mxu0 0
      %375 = vmatmul.mubr.bf16.gmra.mrb[0].mxu0 %v337
      %v376 = vpop.f32.mrb[0].mxu0
      %v377 = vadd.f32 0.0, %v376
      %v378 = vpop.f32.mrb[0].mxu0
      %v379 = vpop.f32.mrb[0].mxu0
      %v380 = vpop.f32.mrb[0].mxu0
      %381 = vdwg.mxu0
      %v382 = vld [vmem:[#allocation2] sm:$0xff]
      %v383 = vsel %vm335, %v377, -inf
      %384 = vmax.xlane.f32.xlu0 %v383
      %v385 = vpop.xlane.xlu0 %384
      %v386 = vmax.f32 %v382, %v385
      %v387 = vsub.f32 %v382, %v386
      %v388 = vmul.f32 %v387, 1.442695
      %v389 = vpow.pop %v388
      %391 = vset.pattern.permute.xlu0 0
      %392 = vperm.xlu0 %391, %v386
      %v393 = vpop.permute.xlu0 %392
      %v395 = vsub.f32 %v377, %v393
      %v396 = vmul.f32 %v395, 1.442695
      %v397 = vpow.pop %v396
      %v398 = vld [vmem:[#allocation3] sm:$0xff]
      %v399 = vmul.f32 %v389, %v398
      %v400 = vsel %vm335, %v397, 0.0
      %401 = vadd.xlane.f32.xlu0 %v400
      %v402 = vpop.xlane.xlu0 %401
      %v403 = vadd.f32 %v399, %v402
      %vm404 = vcmask 7168
      %405 = vst.msk [vmem:[#allocation3] sm:$0xff] %vm404, %v403
      %v406 = vld [vmem:[#allocation4] sm:$0xff]
      %408 = vset.pattern.permute.xlu0 0
      %409 = vperm.xlu0 %408, %v389
      %v410 = vpop.permute.xlu0 %409
      %v412 = vmul.f32 %v410, %v406
      %v413 = vpack.c.bf16 %v397, %v397
      %v415 = vsel %vm335, %v413, 0
      %vm417 = vcmask 1043456
      %v419 = vsel %vm417, %v334, 0
      %421 = vmatprep.subr.bf16.mxu0 0
      %422 = vmatpush1.bf16.msra.mxu0 %v419
      %423 = vmatprep.subr.bf16.mxu0 0
      %424 = vmatpush1.bf16.msra.mxu0 0
      %425 = vmatprep.subr.bf16.mxu0 0
      %426 = vmatpush1.bf16.msra.mxu0 0
      %427 = vmatprep.subr.bf16.mxu0 0
      %428 = vmatpush1.bf16.msra.mxu0 0
      %429 = vmatprep.subr.bf16.mxu0 0
      %430 = vmatpush1.bf16.msra.mxu0 0
      %431 = vmatprep.subr.bf16.mxu0 0
      %432 = vmatpush1.bf16.msra.mxu0 0
      %433 = vmatprep.subr.bf16.mxu0 0
      %434 = vmatpush1.bf16.msra.mxu0 0
      %435 = vmatprep.subr.bf16.mxu0 0
      %436 = vmatpush1.bf16.msra.mxu0 0
      %437 = vmatprep.subr.bf16.mxu0 0
      %438 = vmatpush1.bf16.msra.mxu0 0
      %439 = vmatprep.subr.bf16.mxu0 0
      %440 = vmatpush1.bf16.msra.mxu0 0
      %441 = vmatprep.subr.bf16.mxu0 0
      %442 = vmatpush1.bf16.msra.mxu0 0
      %443 = vmatprep.subr.bf16.mxu0 0
      %444 = vmatpush1.bf16.msra.mxu0 0
      %445 = vmatprep.subr.bf16.mxu0 0
      %446 = vmatpush1.bf16.msra.mxu0 0
      %447 = vmatprep.subr.bf16.mxu0 0
      %448 = vmatpush1.bf16.msra.mxu0 0
      %449 = vmatprep.subr.bf16.mxu0 0
      %450 = vmatpush1.bf16.msra.mxu0 0
      %451 = vmatprep.subr.bf16.mxu0 0
      %452 = vmatpush1.bf16.msra.mxu0 0
      %453 = vmatprep.mubr.bf16.mxu0 0
      %454 = vmatmul.mubr.bf16.gmra.mrb[0].mxu0 %v415
      %v455 = vpop.f32.mrb[0].mxu0
      %v456 = vadd.f32 0.0, %v455
      %v457 = vpop.f32.mrb[0].mxu0
      %v458 = vpop.f32.mrb[0].mxu0
      %v459 = vpop.f32.mrb[0].mxu0
      %460 = vdwg.mxu0
      %v461 = vadd.f32 %v412, %v456
      %462 = vst.msk [vmem:[#allocation4] sm:$0xff] %vm335, %v461
      %463 = vst.msk [vmem:[#allocation2] sm:$0xff] %vm404, %v386
      // Predicated region
      $region37: #{transformer_forward.48} parent=31 // pred_check
        %p464 = pneg %p320
      $region38: #{transformer_forward.48} parent=31 // pred_check_branch
        %466 = sbr.rel (%p464) target = $region40
      $region39: #{transformer_forward.48} parent=31 // pred_region
        %v467 = vld [vmem:[#allocation3] sm:$0xff]
        %v468 = vmax.f32 %v467, 1e-30
        %v469 = vld [vmem:[#allocation4] sm:$0xff]
        %v470 = vrcp.pop %v468
        %472 = vset.pattern.permute.xlu0 0
        %473 = vperm.xlu0 %472, %v470
        %v474 = vpop.permute.xlu0 %473
        %v476 = vmul.f32 %v469, %v474
        %v477 = vpack.c.bf16 %v476, %v476
        %vm478 = vcmask 60416
        %479 = vst.msk [vmem:[%s318] sm:$0xf] %vm478, %v477
      $region40: #{transformer_forward.48} parent=31 // pred_fallthru
        _
      %p480 = scmp.lt.s32.totalorder %s20, 1
      %s481 = scalar_select %p480, %s20, 1
      %p482 = scmp.lt.s32.totalorder %s21, 3
      %s483 = scalar_select %p482, %s21, 3
      %p484 = scmp.lt.s32.totalorder %s22, 0
      %s485 = scalar_select %p484, %s22, 0
      %s486 = sadd.s32 %s485, %s483
      %s487 = smul.addr %s481, 4
      %s488 = sadd.s32 %s486, %s487
      %s489 = smul.addr %s488, 4
      %s490 = scalar_lea.vmem %s3, %s489
      // Predicated region
      $region41: #{transformer_forward.48} parent=31 // pred_check
        %p491 = pneg %p152
      $region42: #{transformer_forward.48} parent=31 // pred_check_branch
        %493 = sbr.rel (%p491) target = $region44
      $region43: #{transformer_forward.48} parent=31 // pred_region
        _
      $region44: #{transformer_forward.48} parent=31 // pred_fallthru
        _
    $region32: #{transformer_forward.48} parent=5 // pred_fallthru
      _
    %p494 = scmp.le.s32.totalorder 2, %s9
    // Predicated region
    $region45: #{transformer_forward.48} parent=5 // pred_check
      %p495 = pneg %p494
    $region46: #{transformer_forward.48} parent=5 // pred_check_branch
      %497 = sbr.rel (%p495) target = $region48
    $region47: #{transformer_forward.48} parent=5 // pred_region
      %s498 = ssub.s32 %s9, 2
      // Predicated region
      $region49: #{transformer_forward.48} parent=47 // pred_check
        %p499 = pneg %p158
      $region50: #{transformer_forward.48} parent=47 // pred_check_branch
        %501 = sbr.rel (%p499) target = $region52
      $region51: #{transformer_forward.48} parent=47 // pred_region
        %p502 = scmp.lt.s32.totalorder %s24, 1
        %s503 = scalar_select %p502, %s24, 1
        %p504 = scmp.lt.s32.totalorder %s25, 3
        %s505 = scalar_select %p504, %s25, 3
        %p506 = scmp.lt.s32.totalorder %s26, 0
        %s507 = scalar_select %p506, %s26, 0
        %s508 = sadd.s32 %s507, %s505
        %s509 = smul.addr %s503, 4
        %s510 = sadd.s32 %s508, %s509
        %s511 = smul.addr %s510, 4
        %s512 = scalar_lea.vmem %s3, %s511
      $region52: #{transformer_forward.48} parent=47 // pred_fallthru
        _
    $region48: #{transformer_forward.48} parent=5 // pred_fallthru
      _
  $region6: #{transformer_forward.48} parent=0 // loop_footer
    %s13 = sadd.s32 1, %s9
  $region7: #{transformer_forward.48} parent=0 // loop_footer_branch
    %8 = sbr.rel target = $region3
  $region8: #{transformer_forward.48} parent=0 // loop_exit
    _

// kernel: transformer_forward.49
$region0: #{transformer_forward.49}
  #allocation0 [shape = 'u32[]', space=smem, size = 0x4, offset = 0x4, fixed_abs, tag = 'smem constant byte address 0x4 - core index']
  #allocation1 [shape = 'u32[144,128]{1,0:T(1,128)}', space=vmem, size = 0x12000, scoped, tag = 'internal scratch']
  #allocation2 [shape = 'f32[16,32]{1,0:T(8,128)}', space=vmem, size = 0x2000, scoped, tag = 'scratch operand']
  %s0 = inlined_call_operand.vmem [shape: bf16[16,32], index: 0, kind: input, shape index: {}]
  %s1 = inlined_call_operand.vmem [shape: bf16[32,32], index: 1, kind: input, shape index: {}]
  %s2 = inlined_call_operand.vmem [shape: bf16[1,32], index: 2, kind: input, shape index: {}]
  %s3 = inlined_call_operand.vmem [shape: bf16[16,32], index: 3, kind: output, shape index: {}]
  %s4 = sld [smem:[#allocation0]]
  $region30: #{transformer_forward.49} parent=0
    _
  %s6 = ssub.s32 1, %s4
  %s7 = scalar_select 0, %s6, %s4
  // Predicated region
  $region2: #{transformer_forward.49} parent=0 // pred_check
    _
  $region3: #{transformer_forward.49} parent=0 // pred_check_branch
    %9 = sbr.rel (0) target = $region5
  $region4: #{transformer_forward.49} parent=0 // pred_region
    _
  $region5: #{transformer_forward.49} parent=0 // pred_fallthru
    _
  // Predicated region
  $region6: #{transformer_forward.49} parent=0 // pred_check
    _
  $region7: #{transformer_forward.49} parent=0 // pred_check_branch
    %11 = sbr.rel (0) target = $region9
  $region8: #{transformer_forward.49} parent=0 // pred_region
    _
  $region9: #{transformer_forward.49} parent=0 // pred_fallthru
    _
  // Predicated region
  $region10: #{transformer_forward.49} parent=0 // pred_check
    _
  $region11: #{transformer_forward.49} parent=0 // pred_check_branch
    %13 = sbr.rel (0) target = $region13
  $region12: #{transformer_forward.49} parent=0 // pred_region
    _
  $region13: #{transformer_forward.49} parent=0 // pred_fallthru
    _
  %p15 = scmp.eq.s32.totalorder 0, 0
  // Predicated region
  $region14: #{transformer_forward.49} parent=0 // pred_check
    %p16 = pneg %p15
  $region15: #{transformer_forward.49} parent=0 // pred_check_branch
    %18 = sbr.rel (%p16) target = $region17
  $region16: #{transformer_forward.49} parent=0 // pred_region
    %vm19 = vcmask 261120
    %20 = vst.msk [vmem:[#allocation2] sm:$0xff] %vm19, 0.0
    %21 = vst.msk [vmem:[#allocation2 + $0x8] sm:$0xff] %vm19, 0.0
  $region17: #{transformer_forward.49} parent=0 // pred_fallthru
    _
  %v22 = vld [vmem:[#allocation2] sm:$0xff]
  %v23 = vld [vmem:[#allocation2 + $0x8] sm:$0xff]
  %v24 = vld [vmem:[%s0] sm:$0xf]
  %v25 = vld [vmem:[%s0 + $0x4] sm:$0xf]
  %v26 = vld [vmem:[%s1] sm:$0xf]
  %v27 = vld [vmem:[%s1 + $0x4] sm:$0xf]
  %v28 = vld [vmem:[%s1 + $0x8] sm:$0xf]
  %v29 = vld [vmem:[%s1 + $0xc] sm:$0xf]
  %v32 = vunpack.c.l.b16 %v24
  %v33 = vunpack.c.l.b16 %v25
  %v34 = vpack.c.b16 %v33, %v32
  %v39 = vunpack.c.l.b16 %v26
  %v40 = vunpack.c.l.b16 %v27
  %v41 = vunpack.c.l.b16 %v28
  %v42 = vunpack.c.l.b16 %v29
  %v43 = vpack.c.b16 %v40, %v39
  %v44 = vpack.c.b16 %v42, %v41
  %vm47 = vcmask 261120
  %v49 = vsel %vm47, %v34, 0
  %51 = vmatprep.subr.bf16.mxu0 0
  %52 = vmatpush1.bf16.msra.mxu0 %v43
  %53 = vmatprep.subr.bf16.mxu0 0
  %54 = vmatpush1.bf16.msra.mxu0 %v44
  %55 = vmatprep.subr.bf16.mxu0 0
  %56 = vmatpush1.bf16.msra.mxu0 0
  %57 = vmatprep.subr.bf16.mxu0 0
  %58 = vmatpush1.bf16.msra.mxu0 0
  %59 = vmatprep.subr.bf16.mxu0 0
  %60 = vmatpush1.bf16.msra.mxu0 0
  %61 = vmatprep.subr.bf16.mxu0 0
  %62 = vmatpush1.bf16.msra.mxu0 0
  %63 = vmatprep.subr.bf16.mxu0 0
  %64 = vmatpush1.bf16.msra.mxu0 0
  %65 = vmatprep.subr.bf16.mxu0 0
  %66 = vmatpush1.bf16.msra.mxu0 0
  %67 = vmatprep.subr.bf16.mxu0 0
  %68 = vmatpush1.bf16.msra.mxu0 0
  %69 = vmatprep.subr.bf16.mxu0 0
  %70 = vmatpush1.bf16.msra.mxu0 0
  %71 = vmatprep.subr.bf16.mxu0 0
  %72 = vmatpush1.bf16.msra.mxu0 0
  %73 = vmatprep.subr.bf16.mxu0 0
  %74 = vmatpush1.bf16.msra.mxu0 0
  %75 = vmatprep.subr.bf16.mxu0 0
  %76 = vmatpush1.bf16.msra.mxu0 0
  %77 = vmatprep.subr.bf16.mxu0 0
  %78 = vmatpush1.bf16.msra.mxu0 0
  %79 = vmatprep.subr.bf16.mxu0 0
  %80 = vmatpush1.bf16.msra.mxu0 0
  %81 = vmatprep.subr.bf16.mxu0 0
  %82 = vmatpush1.bf16.msra.mxu0 0
  %83 = vmatprep.mubr.bf16.mxu0 0
  %84 = vmatmul.mubr.bf16.gmra.mrb[0].mxu0 %v49
  %v85 = vpop.f32.mrb[0].mxu0
  %v86 = vadd.f32 0.0, %v85
  %v87 = vpop.f32.mrb[0].mxu0
  %v88 = vpop.f32.mrb[0].mxu0
  %v89 = vadd.f32 0.0, %v88
  %v90 = vpop.f32.mrb[0].mxu0
  %91 = vdwg.mxu0
  %v92 = vadd.f32 %v22, %v86
  %v93 = vadd.f32 %v23, %v89
  %94 = vst.msk [vmem:[#allocation2] sm:$0xff] %vm47, %v92
  %95 = vst.msk [vmem:[#allocation2 + $0x8] sm:$0xff] %vm47, %v93
  // Predicated region
  $region18: #{transformer_forward.49} parent=0 // pred_check
    %p96 = pneg %p15
  $region19: #{transformer_forward.49} parent=0 // pred_check_branch
    %98 = sbr.rel (%p96) target = $region21
  $region20: #{transformer_forward.49} parent=0 // pred_region
    %v99 = vld [vmem:[#allocation2] sm:$0xff]
    %v100 = vld [vmem:[#allocation2 + $0x8] sm:$0xff]
    %v101 = vld [vmem:[%s2] sm:$0x1]
    %v102 = vunpack.c.l.bf16 %v101
    %v103 = vlaneseq
    %v104 = vshrl.u32 %v103, 7
    %v105 = vsub.s32 0, %v104
    %v106 = vrot.slane %v102, %v105
    %v107 = vadd.f32 %v99, %v106
    %v108 = vadd.f32 %v100, %v106
    %v109 = vpack.c.bf16 %v108, %v107
    %v111 = vunpack.c.l.b16 %v109
    %v112 = vunpack.c.h.b16 %v109
    %v113 = vpack.c.b16 %v111, %v111
    %v114 = vpack.c.b16 %v112, %v112
    %vm117 = vcmask 257024
    %118 = vst.msk [vmem:[%s3] sm:$0xf] %vm117, %v113
    %119 = vst.msk [vmem:[%s3 + $0x4] sm:$0xf] %vm117, %v114
  $region21: #{transformer_forward.49} parent=0 // pred_fallthru
    _
  // Predicated region
  $region22: #{transformer_forward.49} parent=0 // pred_check
    _
  $region23: #{transformer_forward.49} parent=0 // pred_check_branch
    %121 = sbr.rel (0) target = $region25
  $region24: #{transformer_forward.49} parent=0 // pred_region
    _
  $region25: #{transformer_forward.49} parent=0 // pred_fallthru
    _
  // Predicated region
  $region26: #{transformer_forward.49} parent=0 // pred_check
    _
  $region27: #{transformer_forward.49} parent=0 // pred_check_branch
    %123 = sbr.rel (0) target = $region29
  $region28: #{transformer_forward.49} parent=0 // pred_region
    _
  $region29: #{transformer_forward.49} parent=0 // pred_fallthru
    _

// kernel: transformer_forward.52
$region0: #{transformer_forward.52}
  #allocation0 [shape = 'u32[]', space=smem, size = 0x4, offset = 0x4, fixed_abs, tag = 'smem constant byte address 0x4 - core index']
  #allocation1 [shape = 'u32[144,128]{1,0:T(1,128)}', space=vmem, size = 0x12000, scoped, tag = 'internal scratch']
  #allocation2 [shape = 'f32[16,64]{1,0:T(8,128)}', space=vmem, size = 0x2000, scoped, tag = 'scratch operand']
  %s0 = inlined_call_operand.vmem [shape: bf16[16,32], index: 0, kind: input, shape index: {}]
  %s1 = inlined_call_operand.vmem [shape: bf16[32,64], index: 1, kind: input, shape index: {}]
  %s2 = inlined_call_operand.vmem [shape: bf16[1,64], index: 2, kind: input, shape index: {}]
  %s3 = inlined_call_operand.vmem [shape: bf16[16,64], index: 3, kind: output, shape index: {}]
  %s4 = sld [smem:[#allocation0]]
  $region30: #{transformer_forward.52} parent=0
    _
  %s6 = ssub.s32 1, %s4
  %s7 = scalar_select 0, %s6, %s4
  // Predicated region
  $region2: #{transformer_forward.52} parent=0 // pred_check
    _
  $region3: #{transformer_forward.52} parent=0 // pred_check_branch
    %9 = sbr.rel (0) target = $region5
  $region4: #{transformer_forward.52} parent=0 // pred_region
    _
  $region5: #{transformer_forward.52} parent=0 // pred_fallthru
    _
  // Predicated region
  $region6: #{transformer_forward.52} parent=0 // pred_check
    _
  $region7: #{transformer_forward.52} parent=0 // pred_check_branch
    %11 = sbr.rel (0) target = $region9
  $region8: #{transformer_forward.52} parent=0 // pred_region
    _
  $region9: #{transformer_forward.52} parent=0 // pred_fallthru
    _
  // Predicated region
  $region10: #{transformer_forward.52} parent=0 // pred_check
    _
  $region11: #{transformer_forward.52} parent=0 // pred_check_branch
    %13 = sbr.rel (0) target = $region13
  $region12: #{transformer_forward.52} parent=0 // pred_region
    _
  $region13: #{transformer_forward.52} parent=0 // pred_fallthru
    _
  %p15 = scmp.eq.s32.totalorder 0, 0
  // Predicated region
  $region14: #{transformer_forward.52} parent=0 // pred_check
    %p16 = pneg %p15
  $region15: #{transformer_forward.52} parent=0 // pred_check_branch
    %18 = sbr.rel (%p16) target = $region17
  $region16: #{transformer_forward.52} parent=0 // pred_region
    %vm19 = vcmask 523264
    %20 = vst.msk [vmem:[#allocation2] sm:$0xff] %vm19, 0.0
    %21 = vst.msk [vmem:[#allocation2 + $0x8] sm:$0xff] %vm19, 0.0
  $region17: #{transformer_forward.52} parent=0 // pred_fallthru
    _
  %v22 = vld [vmem:[#allocation2] sm:$0xff]
  %v23 = vld [vmem:[#allocation2 + $0x8] sm:$0xff]
  %v24 = vld [vmem:[%s0] sm:$0xf]
  %v25 = vld [vmem:[%s0 + $0x4] sm:$0xf]
  %v26 = vld [vmem:[%s1] sm:$0xf]
  %v27 = vld [vmem:[%s1 + $0x4] sm:$0xf]
  %v28 = vld [vmem:[%s1 + $0x8] sm:$0xf]
  %v29 = vld [vmem:[%s1 + $0xc] sm:$0xf]
  %v32 = vunpack.c.l.b16 %v24
  %v33 = vunpack.c.l.b16 %v25
  %v34 = vpack.c.b16 %v33, %v32
  %v39 = vunpack.c.l.b16 %v26
  %v40 = vunpack.c.l.b16 %v27
  %v41 = vunpack.c.l.b16 %v28
  %v42 = vunpack.c.l.b16 %v29
  %v43 = vpack.c.b16 %v40, %v39
  %v44 = vpack.c.b16 %v42, %v41
  %vm47 = vcmask 261120
  %v49 = vsel %vm47, %v34, 0
  %51 = vmatprep.subr.bf16.mxu0 0
  %52 = vmatpush1.bf16.msra.mxu0 %v43
  %53 = vmatprep.subr.bf16.mxu0 0
  %54 = vmatpush1.bf16.msra.mxu0 %v44
  %55 = vmatprep.subr.bf16.mxu0 0
  %56 = vmatpush1.bf16.msra.mxu0 0
  %57 = vmatprep.subr.bf16.mxu0 0
  %58 = vmatpush1.bf16.msra.mxu0 0
  %59 = vmatprep.subr.bf16.mxu0 0
  %60 = vmatpush1.bf16.msra.mxu0 0
  %61 = vmatprep.subr.bf16.mxu0 0
  %62 = vmatpush1.bf16.msra.mxu0 0
  %63 = vmatprep.subr.bf16.mxu0 0
  %64 = vmatpush1.bf16.msra.mxu0 0
  %65 = vmatprep.subr.bf16.mxu0 0
  %66 = vmatpush1.bf16.msra.mxu0 0
  %67 = vmatprep.subr.bf16.mxu0 0
  %68 = vmatpush1.bf16.msra.mxu0 0
  %69 = vmatprep.subr.bf16.mxu0 0
  %70 = vmatpush1.bf16.msra.mxu0 0
  %71 = vmatprep.subr.bf16.mxu0 0
  %72 = vmatpush1.bf16.msra.mxu0 0
  %73 = vmatprep.subr.bf16.mxu0 0
  %74 = vmatpush1.bf16.msra.mxu0 0
  %75 = vmatprep.subr.bf16.mxu0 0
  %76 = vmatpush1.bf16.msra.mxu0 0
  %77 = vmatprep.subr.bf16.mxu0 0
  %78 = vmatpush1.bf16.msra.mxu0 0
  %79 = vmatprep.subr.bf16.mxu0 0
  %80 = vmatpush1.bf16.msra.mxu0 0
  %81 = vmatprep.subr.bf16.mxu0 0
  %82 = vmatpush1.bf16.msra.mxu0 0
  %83 = vmatprep.mubr.bf16.mxu0 0
  %84 = vmatmul.mubr.bf16.gmra.mrb[0].mxu0 %v49
  %v85 = vpop.f32.mrb[0].mxu0
  %v86 = vadd.f32 0.0, %v85
  %v87 = vpop.f32.mrb[0].mxu0
  %v88 = vpop.f32.mrb[0].mxu0
  %v89 = vadd.f32 0.0, %v88
  %v90 = vpop.f32.mrb[0].mxu0
  %91 = vdwg.mxu0
  %v92 = vadd.f32 %v22, %v86
  %v93 = vadd.f32 %v23, %v89
  %vm94 = vcmask 523264
  %95 = vst.msk [vmem:[#allocation2] sm:$0xff] %vm94, %v92
  %96 = vst.msk [vmem:[#allocation2 + $0x8] sm:$0xff] %vm94, %v93
  // Predicated region
  $region18: #{transformer_forward.52} parent=0 // pred_check
    %p97 = pneg %p15
  $region19: #{transformer_forward.52} parent=0 // pred_check_branch
    %99 = sbr.rel (%p97) target = $region21
  $region20: #{transformer_forward.52} parent=0 // pred_region
    %v100 = vld [vmem:[#allocation2] sm:$0xff]
    %v101 = vld [vmem:[#allocation2 + $0x8] sm:$0xff]
    %v102 = vld [vmem:[%s2] sm:$0x1]
    %v103 = vunpack.c.l.bf16 %v102
    %v104 = vlaneseq
    %v105 = vshrl.u32 %v104, 7
    %v106 = vsub.s32 0, %v105
    %v107 = vrot.slane %v103, %v106
    %v108 = vadd.f32 %v100, %v107
    %v109 = vadd.f32 %v101, %v107
    %v110 = vpack.c.bf16 %v109, %v108
    %v112 = vunpack.c.l.b16 %v110
    %v113 = vunpack.c.h.b16 %v110
    %v114 = vpack.c.b16 %v112, %v112
    %v115 = vpack.c.b16 %v113, %v113
    %vm118 = vcmask 519168
    %119 = vst.msk [vmem:[%s3] sm:$0xf] %vm118, %v114
    %120 = vst.msk [vmem:[%s3 + $0x4] sm:$0xf] %vm118, %v115
  $region21: #{transformer_forward.52} parent=0 // pred_fallthru
    _
  // Predicated region
  $region22: #{transformer_forward.52} parent=0 // pred_check
    _
  $region23: #{transformer_forward.52} parent=0 // pred_check_branch
    %122 = sbr.rel (0) target = $region25
  $region24: #{transformer_forward.52} parent=0 // pred_region
    _
  $region25: #{transformer_forward.52} parent=0 // pred_fallthru
    _
  // Predicated region
  $region26: #{transformer_forward.52} parent=0 // pred_check
    _
  $region27: #{transformer_forward.52} parent=0 // pred_check_branch
    %124 = sbr.rel (0) target = $region29
  $region28: #{transformer_forward.52} parent=0 // pred_region
    _
  $region29: #{transformer_forward.52} parent=0 // pred_fallthru
    _

// kernel: transformer_forward.39
$region0: #{transformer_forward.39}
  #allocation0 [shape = 'u32[]', space=smem, size = 0x4, offset = 0x4, fixed_abs, tag = 'smem constant byte address 0x4 - core index']
  #allocation1 [shape = 'u32[144,128]{1,0:T(1,128)}', space=vmem, size = 0x12000, scoped, tag = 'internal scratch']
  #allocation2 [shape = 'f32[16,32]{1,0:T(8,128)}', space=vmem, size = 0x2000, scoped, tag = 'scratch operand']
  %s0 = inlined_call_operand.vmem [shape: bf16[16,32], index: 0, kind: input, shape index: {}]
  %s1 = inlined_call_operand.vmem [shape: bf16[32,64], index: 1, kind: input, shape index: {}]
  %s2 = inlined_call_operand.vmem [shape: bf16[1,64], index: 2, kind: input, shape index: {}]
  %s3 = inlined_call_operand.vmem [shape: bf16[64,32], index: 3, kind: input, shape index: {}]
  %s4 = inlined_call_operand.vmem [shape: bf16[1,32], index: 4, kind: input, shape index: {}]
  %s5 = inlined_call_operand.vmem [shape: bf16[16,32], index: 5, kind: output, shape index: {}]
  %s6 = sld [smem:[#allocation0]]
  $region38: #{transformer_forward.39} parent=0
    _
  %s8 = ssub.s32 1, %s6
  %s9 = scalar_select 0, %s8, %s6
  // Predicated region
  $region2: #{transformer_forward.39} parent=0 // pred_check
    _
  $region3: #{transformer_forward.39} parent=0 // pred_check_branch
    %11 = sbr.rel (0) target = $region5
  $region4: #{transformer_forward.39} parent=0 // pred_region
    _
  $region5: #{transformer_forward.39} parent=0 // pred_fallthru
    _
  // Predicated region
  $region6: #{transformer_forward.39} parent=0 // pred_check
    _
  $region7: #{transformer_forward.39} parent=0 // pred_check_branch
    %13 = sbr.rel (0) target = $region9
  $region8: #{transformer_forward.39} parent=0 // pred_region
    _
  $region9: #{transformer_forward.39} parent=0 // pred_fallthru
    _
  // Predicated region
  $region10: #{transformer_forward.39} parent=0 // pred_check
    _
  $region11: #{transformer_forward.39} parent=0 // pred_check_branch
    %15 = sbr.rel (0) target = $region13
  $region12: #{transformer_forward.39} parent=0 // pred_region
    _
  $region13: #{transformer_forward.39} parent=0 // pred_fallthru
    _
  // Predicated region
  $region14: #{transformer_forward.39} parent=0 // pred_check
    _
  $region15: #{transformer_forward.39} parent=0 // pred_check_branch
    %17 = sbr.rel (0) target = $region17
  $region16: #{transformer_forward.39} parent=0 // pred_region
    _
  $region17: #{transformer_forward.39} parent=0 // pred_fallthru
    _
  // Predicated region
  $region18: #{transformer_forward.39} parent=0 // pred_check
    _
  $region19: #{transformer_forward.39} parent=0 // pred_check_branch
    %19 = sbr.rel (0) target = $region21
  $region20: #{transformer_forward.39} parent=0 // pred_region
    _
  $region21: #{transformer_forward.39} parent=0 // pred_fallthru
    _
  %p21 = scmp.eq.s32.totalorder 0, 0
  // Predicated region
  $region22: #{transformer_forward.39} parent=0 // pred_check
    %p22 = pneg %p21
  $region23: #{transformer_forward.39} parent=0 // pred_check_branch
    %24 = sbr.rel (%p22) target = $region25
  $region24: #{transformer_forward.39} parent=0 // pred_region
    %vm25 = vcmask 261120
    %26 = vst.msk [vmem:[#allocation2] sm:$0xff] %vm25, 0.0
    %27 = vst.msk [vmem:[#allocation2 + $0x8] sm:$0xff] %vm25, 0.0
  $region25: #{transformer_forward.39} parent=0 // pred_fallthru
    _
  %v28 = vld [vmem:[%s0] sm:$0xf]
  %v29 = vld [vmem:[%s0 + $0x4] sm:$0xf]
  %v30 = vld [vmem:[%s1] sm:$0xf]
  %v31 = vld [vmem:[%s1 + $0x4] sm:$0xf]
  %v32 = vld [vmem:[%s1 + $0x8] sm:$0xf]
  %v33 = vld [vmem:[%s1 + $0xc] sm:$0xf]
  %v34 = vld [vmem:[%s2] sm:$0x1]
  %v35 = vunpack.c.l.bf16 %v34
  %v36 = vlaneseq
  %v37 = vshrl.u32 %v36, 7
  %v38 = vsub.s32 0, %v37
  %v39 = vrot.slane %v35, %v38
  %v42 = vunpack.c.l.b16 %v28
  %v43 = vunpack.c.l.b16 %v29
  %v44 = vpack.c.b16 %v43, %v42
  %v49 = vunpack.c.l.b16 %v30
  %v50 = vunpack.c.l.b16 %v31
  %v51 = vunpack.c.l.b16 %v32
  %v52 = vunpack.c.l.b16 %v33
  %v53 = vpack.c.b16 %v50, %v49
  %v54 = vpack.c.b16 %v52, %v51
  %vm57 = vcmask 261120
  %v59 = vsel %vm57, %v44, 0
  %61 = vmatprep.subr.bf16.mxu0 0
  %62 = vmatpush1.bf16.msra.mxu0 %v53
  %63 = vmatprep.subr.bf16.mxu0 0
  %64 = vmatpush1.bf16.msra.mxu0 %v54
  %65 = vmatprep.subr.bf16.mxu0 0
  %66 = vmatpush1.bf16.msra.mxu0 0
  %67 = vmatprep.subr.bf16.mxu0 0
  %68 = vmatpush1.bf16.msra.mxu0 0
  %69 = vmatprep.subr.bf16.mxu0 0
  %70 = vmatpush1.bf16.msra.mxu0 0
  %71 = vmatprep.subr.bf16.mxu0 0
  %72 = vmatpush1.bf16.msra.mxu0 0
  %73 = vmatprep.subr.bf16.mxu0 0
  %74 = vmatpush1.bf16.msra.mxu0 0
  %75 = vmatprep.subr.bf16.mxu0 0
  %76 = vmatpush1.bf16.msra.mxu0 0
  %77 = vmatprep.subr.bf16.mxu0 0
  %78 = vmatpush1.bf16.msra.mxu0 0
  %79 = vmatprep.subr.bf16.mxu0 0
  %80 = vmatpush1.bf16.msra.mxu0 0
  %81 = vmatprep.subr.bf16.mxu0 0
  %82 = vmatpush1.bf16.msra.mxu0 0
  %83 = vmatprep.subr.bf16.mxu0 0
  %84 = vmatpush1.bf16.msra.mxu0 0
  %85 = vmatprep.subr.bf16.mxu0 0
  %86 = vmatpush1.bf16.msra.mxu0 0
  %87 = vmatprep.subr.bf16.mxu0 0
  %88 = vmatpush1.bf16.msra.mxu0 0
  %89 = vmatprep.subr.bf16.mxu0 0
  %90 = vmatpush1.bf16.msra.mxu0 0
  %91 = vmatprep.subr.bf16.mxu0 0
  %92 = vmatpush1.bf16.msra.mxu0 0
  %93 = vmatprep.mubr.bf16.mxu0 0
  %94 = vmatmul.mubr.bf16.gmra.mrb[0].mxu0 %v59
  %v95 = vpop.f32.mrb[0].mxu0
  %v96 = vadd.f32 %v39, %v95
  %v97 = vpop.f32.mrb[0].mxu0
  %v98 = vpop.f32.mrb[0].mxu0
  %v99 = vadd.f32 %v39, %v98
  %v100 = vpop.f32.mrb[0].mxu0
  %101 = vdwg.mxu0
  %v102 = vmax.f32 %v96, 0.0
  %v103 = vmax.f32 %v99, 0.0
  %v104 = vld [vmem:[#allocation2] sm:$0xff]
  %v105 = vld [vmem:[#allocation2 + $0x8] sm:$0xff]
  %v106 = vpack.c.bf16 %v103, %v102
  %v107 = vld [vmem:[%s3] sm:$0xf]
  %v108 = vld [vmem:[%s3 + $0x4] sm:$0xf]
  %v109 = vld [vmem:[%s3 + $0x8] sm:$0xf]
  %v110 = vld [vmem:[%s3 + $0xc] sm:$0xf]
  %v111 = vld [vmem:[%s3 + $0x10] sm:$0xf]
  %v112 = vld [vmem:[%s3 + $0x14] sm:$0xf]
  %v113 = vld [vmem:[%s3 + $0x18] sm:$0xf]
  %v114 = vld [vmem:[%s3 + $0x1c] sm:$0xf]
  %v123 = vunpack.c.l.b16 %v107
  %v124 = vunpack.c.l.b16 %v108
  %v125 = vunpack.c.l.b16 %v109
  %v126 = vunpack.c.l.b16 %v110
  %v127 = vunpack.c.l.b16 %v111
  %v128 = vunpack.c.l.b16 %v112
  %v129 = vunpack.c.l.b16 %v113
  %v130 = vunpack.c.l.b16 %v114
  %v131 = vpack.c.b16 %v124, %v123
  %v132 = vpack.c.b16 %v126, %v125
  %v133 = vpack.c.b16 %v128, %v127
  %v134 = vpack.c.b16 %v130, %v129
  %vm139 = vcmask 523264
  %v141 = vsel %vm139, %v106, 0
  %143 = vmatprep.subr.bf16.mxu0 0
  %144 = vmatpush1.bf16.msra.mxu0 %v131
  %145 = vmatprep.subr.bf16.mxu0 0
  %146 = vmatpush1.bf16.msra.mxu0 %v132
  %147 = vmatprep.subr.bf16.mxu0 0
  %148 = vmatpush1.bf16.msra.mxu0 %v133
  %149 = vmatprep.subr.bf16.mxu0 0
  %150 = vmatpush1.bf16.msra.mxu0 %v134
  %151 = vmatprep.subr.bf16.mxu0 0
  %152 = vmatpush1.bf16.msra.mxu0 0
  %153 = vmatprep.subr.bf16.mxu0 0
  %154 = vmatpush1.bf16.msra.mxu0 0
  %155 = vmatprep.subr.bf16.mxu0 0
  %156 = vmatpush1.bf16.msra.mxu0 0
  %157 = vmatprep.subr.bf16.mxu0 0
  %158 = vmatpush1.bf16.msra.mxu0 0
  %159 = vmatprep.subr.bf16.mxu0 0
  %160 = vmatpush1.bf16.msra.mxu0 0
  %161 = vmatprep.subr.bf16.mxu0 0
  %162 = vmatpush1.bf16.msra.mxu0 0
  %163 = vmatprep.subr.bf16.mxu0 0
  %164 = vmatpush1.bf16.msra.mxu0 0
  %165 = vmatprep.subr.bf16.mxu0 0
  %166 = vmatpush1.bf16.msra.mxu0 0
  %167 = vmatprep.subr.bf16.mxu0 0
  %168 = vmatpush1.bf16.msra.mxu0 0
  %169 = vmatprep.subr.bf16.mxu0 0
  %170 = vmatpush1.bf16.msra.mxu0 0
  %171 = vmatprep.subr.bf16.mxu0 0
  %172 = vmatpush1.bf16.msra.mxu0 0
  %173 = vmatprep.subr.bf16.mxu0 0
  %174 = vmatpush1.bf16.msra.mxu0 0
  %175 = vmatprep.mubr.bf16.mxu0 0
  %176 = vmatmul.mubr.bf16.gmra.mrb[0].mxu0 %v141
  %v177 = vpop.f32.mrb[0].mxu0
  %v178 = vadd.f32 0.0, %v177
  %v179 = vpop.f32.mrb[0].mxu0
  %v180 = vpop.f32.mrb[0].mxu0
  %v181 = vadd.f32 0.0, %v180
  %v182 = vpop.f32.mrb[0].mxu0
  %183 = vdwg.mxu0
  %v184 = vadd.f32 %v104, %v178
  %v185 = vadd.f32 %v105, %v181
  %186 = vst.msk [vmem:[#allocation2] sm:$0xff] %vm57, %v184
  %187 = vst.msk [vmem:[#allocation2 + $0x8] sm:$0xff] %vm57, %v185
  // Predicated region
  $region26: #{transformer_forward.39} parent=0 // pred_check
    %p188 = pneg %p21
  $region27: #{transformer_forward.39} parent=0 // pred_check_branch
    %190 = sbr.rel (%p188) target = $region29
  $region28: #{transformer_forward.39} parent=0 // pred_region
    %v191 = vld [vmem:[#allocation2] sm:$0xff]
    %v192 = vld [vmem:[#allocation2 + $0x8] sm:$0xff]
    %v193 = vld [vmem:[%s4] sm:$0x1]
    %v194 = vunpack.c.l.bf16 %v193
    %v195 = vlaneseq
    %v196 = vshrl.u32 %v195, 7
    %v197 = vsub.s32 0, %v196
    %v198 = vrot.slane %v194, %v197
    %v199 = vadd.f32 %v191, %v198
    %v200 = vadd.f32 %v192, %v198
    %v201 = vpack.c.bf16 %v200, %v199
    %v203 = vunpack.c.l.b16 %v201
    %v204 = vunpack.c.h.b16 %v201
    %v205 = vpack.c.b16 %v203, %v203
    %v206 = vpack.c.b16 %v204, %v204
    %vm209 = vcmask 257024
    %210 = vst.msk [vmem:[%s5] sm:$0xf] %vm209, %v205
    %211 = vst.msk [vmem:[%s5 + $0x4] sm:$0xf] %vm209, %v206
  $region29: #{transformer_forward.39} parent=0 // pred_fallthru
    _
  // Predicated region
  $region30: #{transformer_forward.39} parent=0 // pred_check
    _
  $region31: #{transformer_forward.39} parent=0 // pred_check_branch
    %213 = sbr.rel (0) target = $region33
  $region32: #{transformer_forward.39} parent=0 // pred_region
    _
  $region33: #{transformer_forward.39} parent=0 // pred_fallthru
    _
  // Predicated region
  $region34: #{transformer_forward.39} parent=0 // pred_check
    _
  $region35: #{transformer_forward.39} parent=0 // pred_check_branch
    %215 = sbr.rel (0) target = $region37
  $region36: #{transformer_forward.39} parent=0 // pred_region
    _
  $region37: #{transformer_forward.39} parent=0 // pred_fallthru
    _

// kernel: transformer_forward.69
$region0: #{transformer_forward.69}
  #allocation0 [shape = 'u32[]', space=smem, size = 0x4, offset = 0x4, fixed_abs, tag = 'smem constant byte address 0x4 - core index']
  #allocation1 [shape = 'u32[144,128]{1,0:T(1,128)}', space=vmem, size = 0x12000, scoped, tag = 'internal scratch']
  #allocation2 [shape = 'f32[16,13]{1,0:T(8,128)}', space=vmem, size = 0x2000, scoped, tag = 'scratch operand']
  %s0 = inlined_call_operand.vmem [shape: bf16[16,32], index: 0, kind: input, shape index: {}]
  %s1 = inlined_call_operand.vmem [shape: bf16[32,13], index: 1, kind: input, shape index: {}]
  %s2 = inlined_call_operand.vmem [shape: bf16[1,13], index: 2, kind: input, shape index: {}]
  %s3 = inlined_call_operand.hbm [shape: f32[16,13], index: 3, kind: output, shape index: {}]
  %s4 = sld [smem:[#allocation0]]
  $region30: #{transformer_forward.69} parent=0
    _
  %s6 = ssub.s32 1, %s4
  %s7 = scalar_select 0, %s6, %s4
  $region1: #{transformer_forward.69} parent=0
    #allocation3 [shape = 'u8[8192]{0}', space=vmem, size = 0x2000, scoped, tag = 'output window, operand 0, single buffered']
    #allocation4 [shape = 's32[1]{0}', space=sflag, size = 0x4, scoped, tag = 'scoped memory for transformer_forward.69']
    %8 = vsyncpa [#allocation4], 0
    // Predicated region
    $region2: #{transformer_forward.69} parent=1 // pred_check
      _
    $region3: #{transformer_forward.69} parent=1 // pred_check_branch
      %10 = sbr.rel (0) target = $region5
    $region4: #{transformer_forward.69} parent=1 // pred_region
      _
    $region5: #{transformer_forward.69} parent=1 // pred_fallthru
      _
    // Predicated region
    $region6: #{transformer_forward.69} parent=1 // pred_check
      _
    $region7: #{transformer_forward.69} parent=1 // pred_check_branch
      %12 = sbr.rel (0) target = $region9
    $region8: #{transformer_forward.69} parent=1 // pred_region
      _
    $region9: #{transformer_forward.69} parent=1 // pred_fallthru
      _
    // Predicated region
    $region10: #{transformer_forward.69} parent=1 // pred_check
      _
    $region11: #{transformer_forward.69} parent=1 // pred_check_branch
      %14 = sbr.rel (0) target = $region13
    $region12: #{transformer_forward.69} parent=1 // pred_region
      _
    $region13: #{transformer_forward.69} parent=1 // pred_fallthru
      _
    %p16 = scmp.eq.s32.totalorder 0, 0
    // Predicated region
    $region14: #{transformer_forward.69} parent=1 // pred_check
      %p17 = pneg %p16
    $region15: #{transformer_forward.69} parent=1 // pred_check_branch
      %19 = sbr.rel (%p17) target = $region17
    $region16: #{transformer_forward.69} parent=1 // pred_region
      %vm20 = vcmask 105472
      %21 = vst.msk [vmem:[#allocation2] sm:$0xff] %vm20, 0.0
      %22 = vst.msk [vmem:[#allocation2 + $0x8] sm:$0xff] %vm20, 0.0
    $region17: #{transformer_forward.69} parent=1 // pred_fallthru
      _
    %v23 = vld [vmem:[#allocation2] sm:$0xff]
    %v24 = vld [vmem:[#allocation2 + $0x8] sm:$0xff]
    %v25 = vld [vmem:[%s0] sm:$0xf]
    %v26 = vld [vmem:[%s0 + $0x4] sm:$0xf]
    %v27 = vld [vmem:[%s1] sm:$0xf]
    %v28 = vld [vmem:[%s1 + $0x4] sm:$0xf]
    %v29 = vld [vmem:[%s1 + $0x8] sm:$0xf]
    %v30 = vld [vmem:[%s1 + $0xc] sm:$0xf]
    %v33 = vunpack.c.l.b16 %v25
    %v34 = vunpack.c.l.b16 %v26
    %v35 = vpack.c.b16 %v34, %v33
    %v40 = vunpack.c.l.b16 %v27
    %v41 = vunpack.c.l.b16 %v28
    %v42 = vunpack.c.l.b16 %v29
    %v43 = vunpack.c.l.b16 %v30
    %v44 = vpack.c.b16 %v41, %v40
    %v45 = vpack.c.b16 %v43, %v42
    %vm48 = vcmask 261120
    %v50 = vsel %vm48, %v35, 0
    %52 = vmatprep.subr.bf16.mxu0 0
    %53 = vmatpush1.bf16.msra.mxu0 %v44
    %54 = vmatprep.subr.bf16.mxu0 0
    %55 = vmatpush1.bf16.msra.mxu0 %v45
    %56 = vmatprep.subr.bf16.mxu0 0
    %57 = vmatpush1.bf16.msra.mxu0 0
    %58 = vmatprep.subr.bf16.mxu0 0
    %59 = vmatpush1.bf16.msra.mxu0 0
    %60 = vmatprep.subr.bf16.mxu0 0
    %61 = vmatpush1.bf16.msra.mxu0 0
    %62 = vmatprep.subr.bf16.mxu0 0
    %63 = vmatpush1.bf16.msra.mxu0 0
    %64 = vmatprep.subr.bf16.mxu0 0
    %65 = vmatpush1.bf16.msra.mxu0 0
    %66 = vmatprep.subr.bf16.mxu0 0
    %67 = vmatpush1.bf16.msra.mxu0 0
    %68 = vmatprep.subr.bf16.mxu0 0
    %69 = vmatpush1.bf16.msra.mxu0 0
    %70 = vmatprep.subr.bf16.mxu0 0
    %71 = vmatpush1.bf16.msra.mxu0 0
    %72 = vmatprep.subr.bf16.mxu0 0
    %73 = vmatpush1.bf16.msra.mxu0 0
    %74 = vmatprep.subr.bf16.mxu0 0
    %75 = vmatpush1.bf16.msra.mxu0 0
    %76 = vmatprep.subr.bf16.mxu0 0
    %77 = vmatpush1.bf16.msra.mxu0 0
    %78 = vmatprep.subr.bf16.mxu0 0
    %79 = vmatpush1.bf16.msra.mxu0 0
    %80 = vmatprep.subr.bf16.mxu0 0
    %81 = vmatpush1.bf16.msra.mxu0 0
    %82 = vmatprep.subr.bf16.mxu0 0
    %83 = vmatpush1.bf16.msra.mxu0 0
    %84 = vmatprep.mubr.bf16.mxu0 0
    %85 = vmatmul.mubr.bf16.gmra.mrb[0].mxu0 %v50
    %v86 = vpop.f32.mrb[0].mxu0
    %v87 = vadd.f32 0.0, %v86
    %v88 = vpop.f32.mrb[0].mxu0
    %v89 = vpop.f32.mrb[0].mxu0
    %v90 = vadd.f32 0.0, %v89
    %v91 = vpop.f32.mrb[0].mxu0
    %92 = vdwg.mxu0
    %v93 = vadd.f32 %v23, %v87
    %v94 = vadd.f32 %v24, %v90
    %vm95 = vcmask 105472
    %96 = vst.msk [vmem:[#allocation2] sm:$0xff] %vm95, %v93
    %97 = vst.msk [vmem:[#allocation2 + $0x8] sm:$0xff] %vm95, %v94
    // Predicated region
    $region18: #{transformer_forward.69} parent=1 // pred_check
      %p98 = pneg %p16
    $region19: #{transformer_forward.69} parent=1 // pred_check_branch
      %100 = sbr.rel (%p98) target = $region21
    $region20: #{transformer_forward.69} parent=1 // pred_region
      %v101 = vld [vmem:[#allocation2] sm:$0xff]
      %v102 = vld [vmem:[#allocation2 + $0x8] sm:$0xff]
      %v103 = vld [vmem:[%s2] sm:$0x1]
      %v104 = vunpack.c.l.bf16 %v103
      %v105 = vlaneseq
      %v106 = vshrl.u32 %v105, 7
      %v107 = vsub.s32 0, %v106
      %v108 = vrot.slane %v104, %v107
      %v109 = vadd.f32 %v101, %v108
      %v110 = vadd.f32 %v102, %v108
      %111 = vst.msk [vmem:[#allocation3] sm:$0xff] %vm95, %v109
      %112 = vst.msk [vmem:[#allocation3 + $0x8] sm:$0xff] %vm95, %v110
    $region21: #{transformer_forward.69} parent=1 // pred_fallthru
      _
    // Predicated region
    $region22: #{transformer_forward.69} parent=1 // pred_check
      _
    $region23: #{transformer_forward.69} parent=1 // pred_check_branch
      %114 = sbr.rel (0) target = $region25
    $region24: #{transformer_forward.69} parent=1 // pred_region
      %s116 = ssub.s32 256, 256
      %117 = vsyncadd [#allocation4], %s116
      %s118 = sshll.u32 [#allocation3], 4
      %s119 = int_to_ptr.vmem [resolvable:$true] %s118
      %124 = dma.vmem_to_hbm [thread:$0]  %s119, 256, %s3, [#allocation4], 128, 128, 8
    $region25: #{transformer_forward.69} parent=1 // pred_fallthru
      _
    // Predicated region
    $region26: #{transformer_forward.69} parent=1 // pred_check
      _
    $region27: #{transformer_forward.69} parent=1 // pred_check_branch
      %126 = sbr.rel (0) target = $region29
    $region28: #{transformer_forward.69} parent=1 // pred_region
      %127 = dma.done [#allocation4], 256
    $region29: #{transformer_forward.69} parent=1 // pred_fallthru
      _
    %128 = vsyncpa [#allocation4], 1

</llo_original>
